<compile_context>
chip_gen: v7x
topology: tpu7x:2x2x1
jax: 0.10.0
libtpu: 0.0.40
codegen_flags: <defaults>
</compile_context>

<pallas_src>
import math

import jax
import jax.numpy as jnp
import numpy as np
from jax import lax
from jax.experimental import pallas as pl
from jax.experimental.pallas import tpu as pltpu

# ---------------- problem sizes (small, deterministic) ----------------
B = 2            # batch
L = 8            # sequence length (number of objects)
D = 32           # d_model
H = 4            # nhead
DH = D // H      # d_per_head
S = 5            # spatial_dim
HL = H * L       # width of the per-head "slab" (head-major columns)
LN_EPS = 1e-5
NEG_BIG = -1e9   # finite "minus infinity" for additive masking


# ---------------------------- Pallas kernel ----------------------------
def spatial_attn_kernel(x_ref, pos_ref, bias_ref, locs_ref,
                        wqk_ref, bqk_ref, wv_ref, bv_ref,
                        wloc_ref, bloc_ref, hmask_ref, seg_ref,
                        wfc_ref, bfc_ref, gamma_ref, beta_ref,
                        out_ref):
    f32 = jnp.float32
    x = x_ref[0]                                     # (L, D)
    qk_in = x + pos_ref[0]                           # with_pos_embed

    # Fused, pre-scaled Q|K projection: one (L, D) @ (D, 2D) MXU op.
    qk = jnp.dot(qk_in, wqk_ref[...], preferred_element_type=f32) + bqk_ref[...]
    q = qk[:, :D]                                    # Wq already carries 1/sqrt(DH)
    k = qk[:, D:]
    v = jnp.dot(x, wv_ref[...], preferred_element_type=f32) + bv_ref[...]   # (L, D)

    # Block-diagonal K / V: tile rows H times and zero off-head columns so that
    # a SINGLE matmul covers all heads (review opts #1/#2).
    hmask = hmask_ref[...]                           # (H*L, D): 1 where row-head==col-head
    k_bd = jnp.concatenate([k] * H, axis=0) * hmask  # (H*L, D): row h*L+t holds k_h[t]
    v_bd = jnp.concatenate([v] * H, axis=0) * hmask  # (H*L, D)

    # All-head score slab in one MXU op: scores[l, h*L+t] = q_h[l] . k_h[t].
    scores = jnp.einsum('ld,td->lt', q, k_bd, preferred_element_type=f32)   # (L, H*L)

    # Spatial term, all heads at once, at intrinsic FLOP count (no inflated
    # block-diagonal weight): S=5 contraction unrolled as VPU FMAs in slab layout.
    loc = locs_ref[0, 0] * wloc_ref[0:1, :]
    for s in range(1, S):
        loc = loc + locs_ref[0, s] * wloc_ref[s:s + 1, :]
    loc = loc + bloc_ref[...]                        # (L, H*L)
    # relu + clamp merged: max(max(x,0), 1e-6) == max(x, 1e-6)
    log_loc = jnp.log(jnp.maximum(loc, 1e-6))

    # Additive key-padding bias (-1e9 on padded keys), broadcast over query rows.
    fused = scores + log_loc + bias_ref[0]           # (L, H*L)

    # Per-head softmax over each contiguous L-lane segment of the slab.
    seg = seg_ref[...]                               # (H*L, H*L) block-diag ones
    m_slab = jnp.zeros((L, HL), f32)
    for h in range(H):
        m_h = jnp.max(fused[:, h * L:(h + 1) * L], axis=-1, keepdims=True)  # (L, 1)
        m_slab = m_slab + m_h * seg[h * L:h * L + 1, :]   # scatter to head-h columns
    e = jnp.exp(fused - m_slab)                      # one EUP pass over the slab
    denom = jnp.dot(e, seg, preferred_element_type=f32)   # per-head sums, broadcast
    p = e / denom                                    # exact division (no approx recip)

    # ONE block-diagonal P @ V matmul -> already-concatenated head outputs (L, D).
    heads = jnp.dot(p, v_bd, preferred_element_type=f32)

    tgt2 = jnp.dot(heads, wfc_ref[...], preferred_element_type=f32) + bfc_ref[...]

    # residual + LayerNorm (post-norm); dropout is p=0.0 -> identity.
    y = x + tgt2
    mu = jnp.mean(y, axis=-1, keepdims=True)
    var = jnp.mean((y - mu) ** 2, axis=-1, keepdims=True)
    y_hat = (y - mu) * lax.rsqrt(var + LN_EPS)
    out_ref[0] = (y_hat * gamma_ref[...] + beta_ref[...]).astype(out_ref.dtype)


# ----------------------- one-time parameter prep -----------------------
def prepare_params(params):
    """Weight-only preprocessing, done once (hoisted out of the per-call path)."""
    f32 = jnp.float32
    scale = 1.0 / math.sqrt(DH)
    # Fold the 1/sqrt(DH) attention scale into Wq / bq, and fuse Q|K projections.
    wqk = jnp.concatenate([params["wq"] * scale, params["wk"]], axis=1)      # (D, 2D)
    bqk = jnp.concatenate([params["bq"] * scale, params["bk"]], axis=1)      # (1, 2D)
    # Spatial weight broadcast to the (head-major) slab columns: col c -> head c//L.
    wloc_slab = jnp.repeat(params["wloc"], L, axis=1)                        # (S, H*L)
    bloc_slab = jnp.repeat(params["bloc"], L, axis=1)                        # (1, H*L)
    # Constant masks used to build block-diagonal operands / per-head reductions.
    row_head = jnp.arange(HL) // L
    col_head = jnp.arange(D) // DH
    head_mask = (row_head[:, None] == col_head[None, :]).astype(f32)         # (H*L, D)
    seg_ones = (row_head[:, None] == row_head[None, :]).astype(f32)          # (H*L, H*L)
    return {
        "wqk": wqk, "bqk": bqk,
        "wv": params["wv"], "bv": params["bv"],
        "wloc_slab": wloc_slab, "bloc_slab": bloc_slab,
        "head_mask": head_mask, "seg_ones": seg_ones,
        "wfc": params["wfc"], "bfc": params["bfc"],
        "gamma": params["gamma"], "beta": params["beta"],
    }


# ------------------------------ wrapper ---------------------------------
def spatial_self_attention_layer(tgt, query_pos, pairwise_locs, key_padding_mask, prep):
    """tgt, query_pos: (B, L, D); pairwise_locs: (B, L, L, S); key_padding_mask: (B, L) bool."""
    f32 = jnp.float32

    # pairwise_locs arranged for the in-kernel slab FMA:
    # locs_rep[b, s, l, h*L + t] = pairwise_locs[b, l, t, s]   (H-tiled along lanes)
    locs_rep = jnp.tile(jnp.transpose(pairwise_locs, (0, 3, 1, 2)), (1, 1, 1, H))

    # Additive key-padding bias in slab layout, NOT replicated over query rows.
    bias_slab = (NEG_BIG * jnp.tile(key_padding_mask.astype(f32), (1, H)))[:, None, :]  # (B,1,H*L)

    in_specs = [
        pl.BlockSpec((1, L, D), lambda b: (b, 0, 0)),          # x (tgt)
        pl.BlockSpec((1, L, D), lambda b: (b, 0, 0)),          # query_pos
        pl.BlockSpec((1, 1, HL), lambda b: (b, 0, 0)),         # key-pad bias slab
        pl.BlockSpec((1, S, L, HL), lambda b: (b, 0, 0, 0)),   # locs_rep
        pl.BlockSpec((D, 2 * D), lambda b: (0, 0)),            # Wq|Wk (scaled, fused)
        pl.BlockSpec((1, 2 * D), lambda b: (0, 0)),            # bq|bk
        pl.BlockSpec((D, D), lambda b: (0, 0)),                # Wv
        pl.BlockSpec((1, D), lambda b: (0, 0)),                # bv
        pl.BlockSpec((S, HL), lambda b: (0, 0)),               # wloc (slab broadcast)
        pl.BlockSpec((1, HL), lambda b: (0, 0)),               # bloc (slab broadcast)
        pl.BlockSpec((HL, D), lambda b: (0, 0)),               # head block mask
        pl.BlockSpec((HL, HL), lambda b: (0, 0)),              # block-diag ones
        pl.BlockSpec((D, D), lambda b: (0, 0)),                # Wfc
        pl.BlockSpec((1, D), lambda b: (0, 0)),                # bfc
        pl.BlockSpec((1, D), lambda b: (0, 0)),                # LN gamma
        pl.BlockSpec((1, D), lambda b: (0, 0)),                # LN beta
    ]
    out_specs = pl.BlockSpec((1, L, D), lambda b: (b, 0, 0))

    out = pl.pallas_call(
        spatial_attn_kernel,
        out_shape=jax.ShapeDtypeStruct((B, L, D), jnp.float32),
        grid=(B,),
        in_specs=in_specs,
        out_specs=out_specs,
        compiler_params=pltpu.CompilerParams(dimension_semantics=("parallel",)),
    )(tgt.astype(f32), query_pos.astype(f32), bias_slab, locs_rep,
      prep["wqk"], prep["bqk"], prep["wv"], prep["bv"],
      prep["wloc_slab"], prep["bloc_slab"], prep["head_mask"], prep["seg_ones"],
      prep["wfc"], prep["bfc"], prep["gamma"], prep["beta"])

    return out


# ------------------------- pure-JAX reference -------------------------
def reference(tgt, query_pos, pairwise_locs, key_padding_mask, params):
    qk_in = tgt + query_pos
    q = qk_in @ params["wq"] + params["bq"]
    k = qk_in @ params["wk"] + params["bk"]
    v = tgt @ params["wv"] + params["bv"]
    qh = q.reshape(B, L, H, DH).transpose(2, 0, 1, 3)
    kh = k.reshape(B, L, H, DH).transpose(2, 0, 1, 3)
    vh = v.reshape(B, L, H, DH).transpose(2, 0, 1, 3)
    attn = jnp.einsum('hblk,hbtk->hblt', qh, kh) / math.sqrt(DH)
    loc = jnp.maximum(jnp.einsum('blts,sh->blth', pairwise_locs, params["wloc"])
                      + params["bloc"][0], 0.0)
    loc = loc.transpose(3, 0, 1, 2)                                    # h b l t
    pad = key_padding_mask[None, :, None, :]
    attn = jnp.where(pad, -jnp.inf, attn)
    loc = jnp.where(pad, 0.0, loc)
    fused = jax.nn.softmax(jnp.log(jnp.maximum(loc, 1e-6)) + attn, axis=-1)
    out = jnp.einsum('hblt,hbtv->hblv', fused, vh)
    out = out.transpose(1, 2, 0, 3).reshape(B, L, D)
    tgt2 = out @ params["wfc"] + params["bfc"]
    y = tgt + tgt2
    mu = y.mean(-1, keepdims=True)
    var = ((y - mu) ** 2).mean(-1, keepdims=True)
    return (y - mu) / jnp.sqrt(var + LN_EPS) * params["gamma"] + params["beta"]


# ------------------------------- main ----------------------------------
def xavier(key, shape):
    fan_in, fan_out = shape[0], shape[1]
    limit = math.sqrt(6.0 / (fan_in + fan_out))
    return jax.random.uniform(key, shape, jnp.float32, -limit, limit)


if __name__ == "__main__":
    root = jax.random.PRNGKey(0)
    keys = jax.random.split(root, 16)

    # Weights stored as (in, out) so the kernel does x @ W + b (== PyTorch x @ W.T + b).
    params = {
        "wq": xavier(keys[0], (D, D)),  "bq": 0.01 * jax.random.normal(keys[1], (1, D)),
        "wk": xavier(keys[2], (D, D)),  "bk": 0.01 * jax.random.normal(keys[3], (1, D)),
        "wv": xavier(keys[4], (D, D)),  "bv": 0.01 * jax.random.normal(keys[5], (1, D)),
        "wfc": xavier(keys[6], (D, D)), "bfc": 0.01 * jax.random.normal(keys[7], (1, D)),
        "wloc": xavier(keys[8], (S, H)),
        "bloc": 0.01 * jax.random.normal(keys[9], (1, H)),
        "gamma": jnp.ones((1, D), jnp.float32),   # LayerNorm default init
        "beta": jnp.zeros((1, D), jnp.float32),
    }

    tgt = jax.random.normal(keys[10], (B, L, D), jnp.float32)
    query_pos = jax.random.normal(keys[11], (B, L, D), jnp.float32)
    pairwise_locs = jax.random.normal(keys[12], (B, L, L, S), jnp.float32)
    key_padding_mask = jnp.zeros((B, L), jnp.bool_).at[1, L - 1].set(True)  # pad last key of batch 1

    prep = prepare_params(params)   # weight-only prep, done once
    out = spatial_self_attention_layer(tgt, query_pos, pairwise_locs, key_padding_mask, prep)
    out = jax.block_until_ready(out)

    # Reference at highest matmul precision so the comparison measures the kernel, not
    # the XLA default f32->bf16 matmul demotion.
    with jax.default_matmul_precision("highest"):
        ref = reference(tgt, query_pos, pairwise_locs, key_padding_mask, params)
        ref = jax.block_until_ready(ref)

    # Approx reciprocal removed -> tolerance tightened 10x vs previous (5e-3 -> 5e-4);
    # the remaining budget covers MXU f32 multi-pass rounding differences only.
    np.testing.assert_allclose(np.asarray(out), np.asarray(ref), rtol=5e-4, atol=5e-4)

    print("KERNEL_OK")
</pallas_src>

<mosaic_0001>
module attributes {stable_mosaic.version = 11 : i64} {
  func.func @spatial_attn_kernel(%arg0: i32, %arg1: memref<1x8x32xf32, #tpu.memory_space<vmem>>, %arg2: memref<1x8x32xf32, #tpu.memory_space<vmem>>, %arg3: memref<1x1x32xf32, #tpu.memory_space<vmem>>, %arg4: memref<1x5x8x32xf32, #tpu.memory_space<vmem>>, %arg5: memref<32x64xf32, #tpu.memory_space<vmem>>, %arg6: memref<1x64xf32, #tpu.memory_space<vmem>>, %arg7: memref<32x32xf32, #tpu.memory_space<vmem>>, %arg8: memref<1x32xf32, #tpu.memory_space<vmem>>, %arg9: memref<5x32xf32, #tpu.memory_space<vmem>>, %arg10: memref<1x32xf32, #tpu.memory_space<vmem>>, %arg11: memref<32x32xf32, #tpu.memory_space<vmem>>, %arg12: memref<32x32xf32, #tpu.memory_space<vmem>>, %arg13: memref<32x32xf32, #tpu.memory_space<vmem>>, %arg14: memref<1x32xf32, #tpu.memory_space<vmem>>, %arg15: memref<1x32xf32, #tpu.memory_space<vmem>>, %arg16: memref<1x32xf32, #tpu.memory_space<vmem>>, %arg17: memref<1x8x32xf32, #tpu.memory_space<vmem>>) attributes {dimension_semantics = [#tpu.dimension_semantics<parallel>], iteration_bounds = array<i64: 2>, scalar_prefetch = 0 : i64, scratch_operands = 0 : i64, tpu.core_type = #tpu.core_type<tc>, window_params = [{transform_indices = @transform_0, window_bounds = array<i64: 1, 8, 32>}, {transform_indices = @transform_1, window_bounds = array<i64: 1, 8, 32>}, {transform_indices = @transform_2, window_bounds = array<i64: 1, 1, 32>}, {transform_indices = @transform_3, window_bounds = array<i64: 1, 5, 8, 32>}, {pipeline_mode = #tpu.pipeline_mode<synchronous>, transform_indices = @transform_4, window_bounds = array<i64: 32, 64>}, {pipeline_mode = #tpu.pipeline_mode<synchronous>, transform_indices = @transform_5, window_bounds = array<i64: 1, 64>}, {pipeline_mode = #tpu.pipeline_mode<synchronous>, transform_indices = @transform_6, window_bounds = array<i64: 32, 32>}, {pipeline_mode = #tpu.pipeline_mode<synchronous>, transform_indices = @transform_7, window_bounds = array<i64: 1, 32>}, {pipeline_mode = #tpu.pipeline_mode<synchronous>, transform_indices = @transform_8, window_bounds = array<i64: 5, 32>}, {pipeline_mode = #tpu.pipeline_mode<synchronous>, transform_indices = @transform_9, window_bounds = array<i64: 1, 32>}, {pipeline_mode = #tpu.pipeline_mode<synchronous>, transform_indices = @transform_10, window_bounds = array<i64: 32, 32>}, {pipeline_mode = #tpu.pipeline_mode<synchronous>, transform_indices = @transform_11, window_bounds = array<i64: 32, 32>}, {pipeline_mode = #tpu.pipeline_mode<synchronous>, transform_indices = @transform_12, window_bounds = array<i64: 32, 32>}, {pipeline_mode = #tpu.pipeline_mode<synchronous>, transform_indices = @transform_13, window_bounds = array<i64: 1, 32>}, {pipeline_mode = #tpu.pipeline_mode<synchronous>, transform_indices = @transform_14, window_bounds = array<i64: 1, 32>}, {pipeline_mode = #tpu.pipeline_mode<synchronous>, transform_indices = @transform_15, window_bounds = array<i64: 1, 32>}, {transform_indices = @transform_16, window_bounds = array<i64: 1, 8, 32>}]} {
    %c0 = arith.constant 0 : index
    %c0_0 = arith.constant 0 : index
    %c0_1 = arith.constant 0 : index
    %0 = vector.load %arg1[%c0, %c0_0, %c0_1] : memref<1x8x32xf32, #tpu.memory_space<vmem>>, vector<1x8x32xf32>
    %1 = vector.shape_cast %0 : vector<1x8x32xf32> to vector<8x32xf32>
    %c0_2 = arith.constant 0 : index
    %c0_3 = arith.constant 0 : index
    %c0_4 = arith.constant 0 : index
    %2 = vector.load %arg2[%c0_2, %c0_3, %c0_4] : memref<1x8x32xf32, #tpu.memory_space<vmem>>, vector<1x8x32xf32>
    %3 = vector.shape_cast %2 : vector<1x8x32xf32> to vector<8x32xf32>
    %4 = arith.addf %1, %3 : vector<8x32xf32>
    %c0_5 = arith.constant 0 : index
    %c0_6 = arith.constant 0 : index
    %5 = vector.load %arg5[%c0_5, %c0_6] : memref<32x64xf32, #tpu.memory_space<vmem>>, vector<32x64xf32>
    %cst = arith.constant dense<0.000000e+00> : vector<8x64xf32>
    %6 = tpu.matmul %4, %5, %cst {dimension_numbers = #tpu.dot_dimension_numbers<[1], [0], [0], [1], [0, 0, 1, 1], [], []>} : vector<8x32xf32>, vector<32x64xf32>, vector<8x64xf32> -> vector<8x64xf32>
    %c0_7 = arith.constant 0 : index
    %c0_8 = arith.constant 0 : index
    %7 = vector.load %arg6[%c0_7, %c0_8] : memref<1x64xf32, #tpu.memory_space<vmem>>, vector<1x64xf32>
    %8 = vector.broadcast %7 : vector<1x64xf32> to vector<8x64xf32>
    %9 = arith.addf %6, %8 : vector<8x64xf32>
    %10 = vector.extract_strided_slice %9 {offsets = [0, 0], sizes = [8, 32], strides = [1, 1]} : vector<8x64xf32> to vector<8x32xf32>
    %11 = vector.extract_strided_slice %9 {offsets = [0, 32], sizes = [8, 32], strides = [1, 1]} : vector<8x64xf32> to vector<8x32xf32>
    %c0_9 = arith.constant 0 : index
    %c0_10 = arith.constant 0 : index
    %12 = vector.load %arg7[%c0_9, %c0_10] : memref<32x32xf32, #tpu.memory_space<vmem>>, vector<32x32xf32>
    %cst_11 = arith.constant dense<0.000000e+00> : vector<8x32xf32>
    %13 = tpu.matmul %1, %12, %cst_11 {dimension_numbers = #tpu.dot_dimension_numbers<[1], [0], [0], [1], [0, 0, 1, 1], [], []>} : vector<8x32xf32>, vector<32x32xf32>, vector<8x32xf32> -> vector<8x32xf32>
    %c0_12 = arith.constant 0 : index
    %c0_13 = arith.constant 0 : index
    %14 = vector.load %arg8[%c0_12, %c0_13] : memref<1x32xf32, #tpu.memory_space<vmem>>, vector<1x32xf32>
    %15 = vector.broadcast %14 : vector<1x32xf32> to vector<8x32xf32>
    %16 = arith.addf %13, %15 : vector<8x32xf32>
    %c0_14 = arith.constant 0 : index
    %c0_15 = arith.constant 0 : index
    %17 = vector.load %arg11[%c0_14, %c0_15] : memref<32x32xf32, #tpu.memory_space<vmem>>, vector<32x32xf32>
    %18 = tpu.concatenate %11, %11, %11, %11 in 0 : vector<8x32xf32>, vector<8x32xf32>, vector<8x32xf32>, vector<8x32xf32> -> vector<32x32xf32>
    %19 = arith.mulf %18, %17 : vector<32x32xf32>
    %20 = tpu.concatenate %16, %16, %16, %16 in 0 : vector<8x32xf32>, vector<8x32xf32>, vector<8x32xf32>, vector<8x32xf32> -> vector<32x32xf32>
    %21 = arith.mulf %20, %17 : vector<32x32xf32>
    "tpu.trace_start"() <{level = 10 : i32, message = "ld,td->lt"}> : () -> ()
    %cst_16 = arith.constant dense<0.000000e+00> : vector<8x32xf32>
    %22 = tpu.matmul %10, %19, %cst_16 {dimension_numbers = #tpu.dot_dimension_numbers<[1], [1], [0], [0], [0, 0, 1, 0], [], []>} : vector<8x32xf32>, vector<32x32xf32>, vector<8x32xf32> -> vector<8x32xf32>
    "tpu.trace_stop"() : () -> ()
    %c0_17 = arith.constant 0 : index
    %c0_18 = arith.constant 0 : index
    %c0_19 = arith.constant 0 : index
    %c0_20 = arith.constant 0 : index
    %23 = vector.load %arg4[%c0_17, %c0_18, %c0_19, %c0_20] : memref<1x5x8x32xf32, #tpu.memory_space<vmem>>, vector<1x1x8x32xf32>
    %24 = vector.shape_cast %23 : vector<1x1x8x32xf32> to vector<8x32xf32>
    %c0_21 = arith.constant 0 : index
    %c0_22 = arith.constant 0 : index
    %25 = vector.load %arg9[%c0_21, %c0_22] : memref<5x32xf32, #tpu.memory_space<vmem>>, vector<1x32xf32>
    %26 = vector.broadcast %25 : vector<1x32xf32> to vector<8x32xf32>
    %27 = arith.mulf %24, %26 : vector<8x32xf32>
    %c0_23 = arith.constant 0 : index
    %c1 = arith.constant 1 : index
    %c0_24 = arith.constant 0 : index
    %c0_25 = arith.constant 0 : index
    %28 = vector.load %arg4[%c0_23, %c1, %c0_24, %c0_25] : memref<1x5x8x32xf32, #tpu.memory_space<vmem>>, vector<1x1x8x32xf32>
    %29 = vector.shape_cast %28 : vector<1x1x8x32xf32> to vector<8x32xf32>
    %c1_26 = arith.constant 1 : index
    %c0_27 = arith.constant 0 : index
    %30 = vector.load %arg9[%c1_26, %c0_27] : memref<5x32xf32, #tpu.memory_space<vmem>>, vector<1x32xf32>
    %31 = vector.broadcast %30 : vector<1x32xf32> to vector<8x32xf32>
    %32 = arith.mulf %29, %31 : vector<8x32xf32>
    %33 = arith.addf %27, %32 : vector<8x32xf32>
    %c0_28 = arith.constant 0 : index
    %c2 = arith.constant 2 : index
    %c0_29 = arith.constant 0 : index
    %c0_30 = arith.constant 0 : index
    %34 = vector.load %arg4[%c0_28, %c2, %c0_29, %c0_30] : memref<1x5x8x32xf32, #tpu.memory_space<vmem>>, vector<1x1x8x32xf32>
    %35 = vector.shape_cast %34 : vector<1x1x8x32xf32> to vector<8x32xf32>
    %c2_31 = arith.constant 2 : index
    %c0_32 = arith.constant 0 : index
    %36 = vector.load %arg9[%c2_31, %c0_32] : memref<5x32xf32, #tpu.memory_space<vmem>>, vector<1x32xf32>
    %37 = vector.broadcast %36 : vector<1x32xf32> to vector<8x32xf32>
    %38 = arith.mulf %35, %37 : vector<8x32xf32>
    %39 = arith.addf %33, %38 : vector<8x32xf32>
    %c0_33 = arith.constant 0 : index
    %c3 = arith.constant 3 : index
    %c0_34 = arith.constant 0 : index
    %c0_35 = arith.constant 0 : index
    %40 = vector.load %arg4[%c0_33, %c3, %c0_34, %c0_35] : memref<1x5x8x32xf32, #tpu.memory_space<vmem>>, vector<1x1x8x32xf32>
    %41 = vector.shape_cast %40 : vector<1x1x8x32xf32> to vector<8x32xf32>
    %c3_36 = arith.constant 3 : index
    %c0_37 = arith.constant 0 : index
    %42 = vector.load %arg9[%c3_36, %c0_37] : memref<5x32xf32, #tpu.memory_space<vmem>>, vector<1x32xf32>
    %43 = vector.broadcast %42 : vector<1x32xf32> to vector<8x32xf32>
    %44 = arith.mulf %41, %43 : vector<8x32xf32>
    %45 = arith.addf %39, %44 : vector<8x32xf32>
    %c0_38 = arith.constant 0 : index
    %c4 = arith.constant 4 : index
    %c0_39 = arith.constant 0 : index
    %c0_40 = arith.constant 0 : index
    %46 = vector.load %arg4[%c0_38, %c4, %c0_39, %c0_40] : memref<1x5x8x32xf32, #tpu.memory_space<vmem>>, vector<1x1x8x32xf32>
    %47 = vector.shape_cast %46 : vector<1x1x8x32xf32> to vector<8x32xf32>
    %c4_41 = arith.constant 4 : index
    %c0_42 = arith.constant 0 : index
    %48 = vector.load %arg9[%c4_41, %c0_42] : memref<5x32xf32, #tpu.memory_space<vmem>>, vector<1x32xf32>
    %49 = vector.broadcast %48 : vector<1x32xf32> to vector<8x32xf32>
    %50 = arith.mulf %47, %49 : vector<8x32xf32>
    %51 = arith.addf %45, %50 : vector<8x32xf32>
    %c0_43 = arith.constant 0 : index
    %c0_44 = arith.constant 0 : index
    %52 = vector.load %arg10[%c0_43, %c0_44] : memref<1x32xf32, #tpu.memory_space<vmem>>, vector<1x32xf32>
    %53 = vector.broadcast %52 : vector<1x32xf32> to vector<8x32xf32>
    %54 = arith.addf %51, %53 : vector<8x32xf32>
    %cst_45 = arith.constant 9.99999997E-7 : f32
    %55 = vector.broadcast %cst_45 : f32 to vector<8x32xf32>
    %56 = arith.maximumf %54, %55 : vector<8x32xf32>
    %57 = math.log %56 : vector<8x32xf32>
    %58 = arith.addf %22, %57 : vector<8x32xf32>
    %c0_46 = arith.constant 0 : index
    %c0_47 = arith.constant 0 : index
    %c0_48 = arith.constant 0 : index
    %59 = vector.load %arg3[%c0_46, %c0_47, %c0_48] : memref<1x1x32xf32, #tpu.memory_space<vmem>>, vector<1x1x32xf32>
    %60 = vector.shape_cast %59 : vector<1x1x32xf32> to vector<1x32xf32>
    %61 = vector.broadcast %60 : vector<1x32xf32> to vector<8x32xf32>
    %62 = arith.addf %58, %61 : vector<8x32xf32>
    %c0_49 = arith.constant 0 : index
    %c0_50 = arith.constant 0 : index
    %63 = vector.load %arg12[%c0_49, %c0_50] : memref<32x32xf32, #tpu.memory_space<vmem>>, vector<32x32xf32>
    %cst_51 = arith.constant 0.000000e+00 : f32
    %64 = vector.broadcast %cst_51 : f32 to vector<8x32xf32>
    %65 = vector.extract_strided_slice %62 {offsets = [0, 0], sizes = [8, 8], strides = [1, 1]} : vector<8x32xf32> to vector<8x8xf32>
    %cst_52 = arith.constant dense<0xFF800000> : vector<8xf32>
    %66 = vector.multi_reduction <maximumf>, %65, %cst_52 [1] : vector<8x8xf32> to vector<8xf32>
    %67 = vector.shape_cast %66 : vector<8xf32> to vector<8x1xf32>
    %68 = vector.extract_strided_slice %63 {offsets = [0, 0], sizes = [1, 32], strides = [1, 1]} : vector<32x32xf32> to vector<1x32xf32>
    %69 = vector.broadcast %67 : vector<8x1xf32> to vector<8x32xf32>
    %70 = vector.broadcast %68 : vector<1x32xf32> to vector<8x32xf32>
    %71 = arith.mulf %69, %70 : vector<8x32xf32>
    %72 = arith.addf %64, %71 : vector<8x32xf32>
    %73 = vector.extract_strided_slice %62 {offsets = [0, 8], sizes = [8, 8], strides = [1, 1]} : vector<8x32xf32> to vector<8x8xf32>
    %cst_53 = arith.constant dense<0xFF800000> : vector<8xf32>
    %74 = vector.multi_reduction <maximumf>, %73, %cst_53 [1] : vector<8x8xf32> to vector<8xf32>
    %75 = vector.shape_cast %74 : vector<8xf32> to vector<8x1xf32>
    %76 = vector.extract_strided_slice %63 {offsets = [8, 0], sizes = [1, 32], strides = [1, 1]} : vector<32x32xf32> to vector<1x32xf32>
    %77 = vector.broadcast %75 : vector<8x1xf32> to vector<8x32xf32>
    %78 = vector.broadcast %76 : vector<1x32xf32> to vector<8x32xf32>
    %79 = arith.mulf %77, %78 : vector<8x32xf32>
    %80 = arith.addf %72, %79 : vector<8x32xf32>
    %81 = vector.extract_strided_slice %62 {offsets = [0, 16], sizes = [8, 8], strides = [1, 1]} : vector<8x32xf32> to vector<8x8xf32>
    %cst_54 = arith.constant dense<0xFF800000> : vector<8xf32>
    %82 = vector.multi_reduction <maximumf>, %81, %cst_54 [1] : vector<8x8xf32> to vector<8xf32>
    %83 = vector.shape_cast %82 : vector<8xf32> to vector<8x1xf32>
    %84 = vector.extract_strided_slice %63 {offsets = [16, 0], sizes = [1, 32], strides = [1, 1]} : vector<32x32xf32> to vector<1x32xf32>
    %85 = vector.broadcast %83 : vector<8x1xf32> to vector<8x32xf32>
    %86 = vector.broadcast %84 : vector<1x32xf32> to vector<8x32xf32>
    %87 = arith.mulf %85, %86 : vector<8x32xf32>
    %88 = arith.addf %80, %87 : vector<8x32xf32>
    %89 = vector.extract_strided_slice %62 {offsets = [0, 24], sizes = [8, 8], strides = [1, 1]} : vector<8x32xf32> to vector<8x8xf32>
    %cst_55 = arith.constant dense<0xFF800000> : vector<8xf32>
    %90 = vector.multi_reduction <maximumf>, %89, %cst_55 [1] : vector<8x8xf32> to vector<8xf32>
    %91 = vector.shape_cast %90 : vector<8xf32> to vector<8x1xf32>
    %92 = vector.extract_strided_slice %63 {offsets = [24, 0], sizes = [1, 32], strides = [1, 1]} : vector<32x32xf32> to vector<1x32xf32>
    %93 = vector.broadcast %91 : vector<8x1xf32> to vector<8x32xf32>
    %94 = vector.broadcast %92 : vector<1x32xf32> to vector<8x32xf32>
    %95 = arith.mulf %93, %94 : vector<8x32xf32>
    %96 = arith.addf %88, %95 : vector<8x32xf32>
    %97 = arith.subf %62, %96 : vector<8x32xf32>
    %98 = math.exp %97 : vector<8x32xf32>
    %cst_56 = arith.constant dense<0.000000e+00> : vector<8x32xf32>
    %99 = tpu.matmul %98, %63, %cst_56 {dimension_numbers = #tpu.dot_dimension_numbers<[1], [0], [0], [1], [0, 0, 1, 1], [], []>} : vector<8x32xf32>, vector<32x32xf32>, vector<8x32xf32> -> vector<8x32xf32>
    %100 = arith.divf %98, %99 : vector<8x32xf32>
    %cst_57 = arith.constant dense<0.000000e+00> : vector<8x32xf32>
    %101 = tpu.matmul %100, %21, %cst_57 {dimension_numbers = #tpu.dot_dimension_numbers<[1], [0], [0], [1], [0, 0, 1, 1], [], []>} : vector<8x32xf32>, vector<32x32xf32>, vector<8x32xf32> -> vector<8x32xf32>
    %c0_58 = arith.constant 0 : index
    %c0_59 = arith.constant 0 : index
    %102 = vector.load %arg13[%c0_58, %c0_59] : memref<32x32xf32, #tpu.memory_space<vmem>>, vector<32x32xf32>
    %cst_60 = arith.constant dense<0.000000e+00> : vector<8x32xf32>
    %103 = tpu.matmul %101, %102, %cst_60 {dimension_numbers = #tpu.dot_dimension_numbers<[1], [0], [0], [1], [0, 0, 1, 1], [], []>} : vector<8x32xf32>, vector<32x32xf32>, vector<8x32xf32> -> vector<8x32xf32>
    %c0_61 = arith.constant 0 : index
    %c0_62 = arith.constant 0 : index
    %104 = vector.load %arg14[%c0_61, %c0_62] : memref<1x32xf32, #tpu.memory_space<vmem>>, vector<1x32xf32>
    %105 = vector.broadcast %104 : vector<1x32xf32> to vector<8x32xf32>
    %106 = arith.addf %103, %105 : vector<8x32xf32>
    %107 = arith.addf %1, %106 : vector<8x32xf32>
    %cst_63 = arith.constant dense<0.000000e+00> : vector<8xf32>
    %108 = vector.multi_reduction <add>, %107, %cst_63 [1] : vector<8x32xf32> to vector<8xf32>
    %109 = vector.shape_cast %108 : vector<8xf32> to vector<8x1xf32>
    %cst_64 = arith.constant 3.200000e+01 : f32
    %110 = vector.broadcast %cst_64 : f32 to vector<8x1xf32>
    %111 = arith.divf %109, %110 : vector<8x1xf32>
    %112 = vector.broadcast %111 : vector<8x1xf32> to vector<8x32xf32>
    %113 = arith.subf %107, %112 : vector<8x32xf32>
    %114 = arith.mulf %113, %113 : vector<8x32xf32>
    %cst_65 = arith.constant dense<0.000000e+00> : vector<8xf32>
    %115 = vector.multi_reduction <add>, %114, %cst_65 [1] : vector<8x32xf32> to vector<8xf32>
    %116 = vector.shape_cast %115 : vector<8xf32> to vector<8x1xf32>
    %cst_66 = arith.constant 3.200000e+01 : f32
    %117 = vector.broadcast %cst_66 : f32 to vector<8x1xf32>
    %118 = arith.divf %116, %117 : vector<8x1xf32>
    %119 = vector.broadcast %111 : vector<8x1xf32> to vector<8x32xf32>
    %120 = arith.subf %107, %119 : vector<8x32xf32>
    %cst_67 = arith.constant 9.99999974E-6 : f32
    %121 = vector.broadcast %cst_67 : f32 to vector<8x1xf32>
    %122 = arith.addf %118, %121 : vector<8x1xf32>
    %123 = math.rsqrt %122 : vector<8x1xf32>
    %124 = vector.broadcast %123 : vector<8x1xf32> to vector<8x32xf32>
    %125 = arith.mulf %120, %124 : vector<8x32xf32>
    %c0_68 = arith.constant 0 : index
    %c0_69 = arith.constant 0 : index
    %126 = vector.load %arg15[%c0_68, %c0_69] : memref<1x32xf32, #tpu.memory_space<vmem>>, vector<1x32xf32>
    %127 = vector.broadcast %126 : vector<1x32xf32> to vector<8x32xf32>
    %128 = arith.mulf %125, %127 : vector<8x32xf32>
    %c0_70 = arith.constant 0 : index
    %c0_71 = arith.constant 0 : index
    %129 = vector.load %arg16[%c0_70, %c0_71] : memref<1x32xf32, #tpu.memory_space<vmem>>, vector<1x32xf32>
    %130 = vector.broadcast %129 : vector<1x32xf32> to vector<8x32xf32>
    %131 = arith.addf %128, %130 : vector<8x32xf32>
    %c0_72 = arith.constant 0 : index
    %c0_73 = arith.constant 0 : index
    %c0_74 = arith.constant 0 : index
    %132 = vector.load %arg17[%c0_72, %c0_73, %c0_74] : memref<1x8x32xf32, #tpu.memory_space<vmem>>, vector<1x8x32xf32>
    %133 = vector.shape_cast %132 : vector<1x8x32xf32> to vector<8x32xf32>
    %134 = vector.shape_cast %131 : vector<8x32xf32> to vector<1x8x32xf32>
    tpu.vector_store %arg17[%c0_72, %c0_73, %c0_74], %134 {strides = array<i32>} : memref<1x8x32xf32, #tpu.memory_space<vmem>>, vector<1x8x32xf32>,
    return
  }
  func.func @transform_0(%arg0: i32) -> (i32, i32, i32) {
    %c0_i32 = arith.constant 0 : i32
    %c0_i32_0 = arith.constant 0 : i32
    %c0_i32_1 = arith.constant 0 : i32
    return %arg0, %c0_i32, %c0_i32_0 : i32, i32, i32
  }
  func.func @transform_1(%arg0: i32) -> (i32, i32, i32) {
    %c0_i32 = arith.constant 0 : i32
    %c0_i32_0 = arith.constant 0 : i32
    %c0_i32_1 = arith.constant 0 : i32
    return %arg0, %c0_i32, %c0_i32_0 : i32, i32, i32
  }
  func.func @transform_2(%arg0: i32) -> (i32, i32, i32) {
    %c0_i32 = arith.constant 0 : i32
    %c0_i32_0 = arith.constant 0 : i32
    %c0_i32_1 = arith.constant 0 : i32
    return %arg0, %c0_i32, %c0_i32_0 : i32, i32, i32
  }
  func.func @transform_3(%arg0: i32) -> (i32, i32, i32, i32) {
    %c0_i32 = arith.constant 0 : i32
    %c0_i32_0 = arith.constant 0 : i32
    %c0_i32_1 = arith.constant 0 : i32
    %c0_i32_2 = arith.constant 0 : i32
    return %arg0, %c0_i32, %c0_i32_0, %c0_i32_1 : i32, i32, i32, i32
  }
  func.func @transform_4(%arg0: i32) -> (i32, i32) {
    %c0_i32 = arith.constant 0 : i32
    %c0_i32_0 = arith.constant 0 : i32
    %c0_i32_1 = arith.constant 0 : i32
    return %c0_i32, %c0_i32_0 : i32, i32
  }
  func.func @transform_5(%arg0: i32) -> (i32, i32) {
    %c0_i32 = arith.constant 0 : i32
    %c0_i32_0 = arith.constant 0 : i32
    %c0_i32_1 = arith.constant 0 : i32
    return %c0_i32, %c0_i32_0 : i32, i32
  }
  func.func @transform_6(%arg0: i32) -> (i32, i32) {
    %c0_i32 = arith.constant 0 : i32
    %c0_i32_0 = arith.constant 0 : i32
    %c0_i32_1 = arith.constant 0 : i32
    return %c0_i32, %c0_i32_0 : i32, i32
  }
  func.func @transform_7(%arg0: i32) -> (i32, i32) {
    %c0_i32 = arith.constant 0 : i32
    %c0_i32_0 = arith.constant 0 : i32
    %c0_i32_1 = arith.constant 0 : i32
    return %c0_i32, %c0_i32_0 : i32, i32
  }
  func.func @transform_8(%arg0: i32) -> (i32, i32) {
    %c0_i32 = arith.constant 0 : i32
    %c0_i32_0 = arith.constant 0 : i32
    %c0_i32_1 = arith.constant 0 : i32
    return %c0_i32, %c0_i32_0 : i32, i32
  }
  func.func @transform_9(%arg0: i32) -> (i32, i32) {
    %c0_i32 = arith.constant 0 : i32
    %c0_i32_0 = arith.constant 0 : i32
    %c0_i32_1 = arith.constant 0 : i32
    return %c0_i32, %c0_i32_0 : i32, i32
  }
  func.func @transform_10(%arg0: i32) -> (i32, i32) {
    %c0_i32 = arith.constant 0 : i32
    %c0_i32_0 = arith.constant 0 : i32
    %c0_i32_1 = arith.constant 0 : i32
    return %c0_i32, %c0_i32_0 : i32, i32
  }
  func.func @transform_11(%arg0: i32) -> (i32, i32) {
    %c0_i32 = arith.constant 0 : i32
    %c0_i32_0 = arith.constant 0 : i32
    %c0_i32_1 = arith.constant 0 : i32
    return %c0_i32, %c0_i32_0 : i32, i32
  }
  func.func @transform_12(%arg0: i32) -> (i32, i32) {
    %c0_i32 = arith.constant 0 : i32
    %c0_i32_0 = arith.constant 0 : i32
    %c0_i32_1 = arith.constant 0 : i32
    return %c0_i32, %c0_i32_0 : i32, i32
  }
  func.func @transform_13(%arg0: i32) -> (i32, i32) {
    %c0_i32 = arith.constant 0 : i32
    %c0_i32_0 = arith.constant 0 : i32
    %c0_i32_1 = arith.constant 0 : i32
    return %c0_i32, %c0_i32_0 : i32, i32
  }
  func.func @transform_14(%arg0: i32) -> (i32, i32) {
    %c0_i32 = arith.constant 0 : i32
    %c0_i32_0 = arith.constant 0 : i32
    %c0_i32_1 = arith.constant 0 : i32
    return %c0_i32, %c0_i32_0 : i32, i32
  }
  func.func @transform_15(%arg0: i32) -> (i32, i32) {
    %c0_i32 = arith.constant 0 : i32
    %c0_i32_0 = arith.constant 0 : i32
    %c0_i32_1 = arith.constant 0 : i32
    return %c0_i32, %c0_i32_0 : i32, i32
  }
  func.func @transform_16(%arg0: i32) -> (i32, i32, i32) {
    %c0_i32 = arith.constant 0 : i32
    %c0_i32_0 = arith.constant 0 : i32
    %c0_i32_1 = arith.constant 0 : i32
    return %arg0, %c0_i32, %c0_i32_0 : i32, i32, i32
  }
}

</mosaic_0001>

<llo_original>
// kernel: tpu_custom_call.1
$region0: #{tpu_custom_call.1}
  #allocation0 [shape = 'u32[]', space=smem, size = 0x4, offset = 0x4, fixed_abs, tag = 'smem constant byte address 0x4 - core index']
  #allocation1 [shape = 'u32[144,128]{1,0:T(1,128)}', space=vmem, size = 0x12000, scoped, tag = 'internal scratch']
  %s0 = inlined_call_operand.hbm [shape: f32[2,8,32], index: 0, kind: input, shape index: {}]
  %s1 = inlined_call_operand.hbm [shape: f32[2,8,32], index: 1, kind: input, shape index: {}]
  %s2 = inlined_call_operand.vmem [shape: f32[2,1,32], index: 2, kind: input, shape index: {}]
  %s3 = inlined_call_operand.hbm [shape: f32[2,5,8,32], index: 3, kind: input, shape index: {}]
  %s4 = inlined_call_operand.hbm [shape: f32[32,64], index: 4, kind: input, shape index: {}]
  %s5 = inlined_call_operand.vmem [shape: f32[1,64], index: 5, kind: input, shape index: {}]
  %s6 = inlined_call_operand.hbm [shape: f32[32,32], index: 6, kind: input, shape index: {}]
  %s7 = inlined_call_operand.vmem [shape: f32[1,32], index: 7, kind: input, shape index: {}]
  %s8 = inlined_call_operand.hbm [shape: f32[5,32], index: 8, kind: input, shape index: {}]
  %s9 = inlined_call_operand.vmem [shape: f32[1,32], index: 9, kind: input, shape index: {}]
  %s10 = inlined_call_operand.vmem [shape: f32[32,32], index: 10, kind: input, shape index: {}]
  %s11 = inlined_call_operand.hbm [shape: f32[32,32], index: 11, kind: input, shape index: {}]
  %s12 = inlined_call_operand.hbm [shape: f32[32,32], index: 12, kind: input, shape index: {}]
  %s13 = inlined_call_operand.vmem [shape: f32[1,32], index: 13, kind: input, shape index: {}]
  %s14 = inlined_call_operand.vmem [shape: f32[1,32], index: 14, kind: input, shape index: {}]
  %s15 = inlined_call_operand.vmem [shape: f32[1,32], index: 15, kind: input, shape index: {}]
  %s16 = inlined_call_operand.hbm [shape: f32[2,8,32], index: 16, kind: output, shape index: {}]
  %s17 = sld [smem:[#allocation0]]
  $region129: #{tpu_custom_call.1} parent=0
    _
  %s19 = ssub.s32 1, %s17
  %s20 = scalar_select 0, %s19, %s17
  $region1: #{tpu_custom_call.1} parent=0
    #allocation2 [shape = 'u8[8192]{0}', space=vmem, size = 0x2000, scoped, tag = 'input window, operand 0']
    #allocation3 [shape = 's32[2]{0}', space=sflag, size = 0x8, scoped, tag = 'scoped memory for tpu_custom_call.1']
    #allocation4 [shape = 's32[2]{0}', space=sflag, size = 0x8, scoped, tag = 'scoped memory for tpu_custom_call.1']
    #allocation5 [shape = 'u8[8192]{0}', space=vmem, size = 0x2000, scoped, tag = 'input window, operand 1']
    #allocation6 [shape = 's32[2]{0}', space=sflag, size = 0x8, scoped, tag = 'scoped memory for tpu_custom_call.1']
    #allocation7 [shape = 'u8[40960]{0}', space=vmem, size = 0xa000, scoped, tag = 'input window, operand 3']
    #allocation8 [shape = 'u8[16384]{0}', space=vmem, size = 0x4000, scoped, tag = 'input window, operand 4, single buffered']
    #allocation9 [shape = 's32[1]{0}', space=sflag, size = 0x4, scoped, tag = 'scoped memory for tpu_custom_call.1']
    #allocation10 [shape = 'u8[16384]{0}', space=vmem, size = 0x4000, scoped, tag = 'input window, operand 6, single buffered']
    #allocation11 [shape = 'u8[4096]{0}', space=vmem, size = 0x1000, scoped, tag = 'input window, operand 8, single buffered']
    #allocation12 [shape = 's32[1]{0}', space=sflag, size = 0x4, scoped, tag = 'scoped memory for tpu_custom_call.1']
    #allocation13 [shape = 'u8[16384]{0}', space=vmem, size = 0x4000, scoped, tag = 'input window, operand 11, single buffered']
    #allocation14 [shape = 'u8[16384]{0}', space=vmem, size = 0x4000, scoped, tag = 'input window, operand 12, single buffered']
    #allocation15 [shape = 's32[1]{0}', space=sflag, size = 0x4, scoped, tag = 'scoped memory for tpu_custom_call.1']
    #allocation16 [shape = 'u8[8192]{0}', space=vmem, size = 0x2000, scoped, tag = 'output window, operand 0']
    %21 = vsyncpa [#allocation3], 0
    %s22 = scalar_lea.sflag [#allocation3], 1
    %23 = vsyncpa %s22, 0
    %24 = vsyncpa [#allocation6], 0
    %s25 = scalar_lea.sflag [#allocation6], 1
    %26 = vsyncpa %s25, 0
    %27 = vsyncpa [#allocation9], 0
    %28 = vsyncpa [#allocation12], 0
    %29 = vsyncpa [#allocation15], 0
    %30 = vsyncpa [#allocation4], 0
    %s31 = scalar_lea.sflag [#allocation4], 1
    %32 = vsyncpa %s31, 0
    loop: start=0, step=1, limit=4
    $region2: #{tpu_custom_call.1} parent=1 // loop_pre_header
      _
    $region3: #{tpu_custom_call.1} parent=1 // loop_header
      %s34 = sphi 0, %s38
      %p35 = scmp.ge.s32.totalorder %s34, 4
      %s44 = sphi 0, %s46
      %s47 = sphi 0, %s44
      %s48 = sphi 0, %s47
      %s64 = sphi 0, %s48
      %s70 = sphi 0, %s72
      %s73 = sphi 0, %s70
      %s74 = sphi 0, %s73
      %s90 = sphi 0, %s74
      %s96 = sphi 0, %s98
      %s99 = sphi 0, %s96
      %s100 = sphi 0, %s99
      %s116 = sphi 0, %s100
      %s122 = sphi 0, %s124
      %s125 = sphi 0, %s122
      %s126 = sphi 0, %s125
      %s142 = sphi 0, %s126
      %s146 = sphi 0, %s146
      %s148 = sphi 0, %s146
      %s149 = sphi 0, %s148
      %s163 = sphi 0, %s149
      %s167 = sphi 0, %s167
      %s169 = sphi 0, %s167
      %s170 = sphi 0, %s169
      %s184 = sphi 0, %s170
      %s188 = sphi 0, %s188
      %s190 = sphi 0, %s188
      %s191 = sphi 0, %s190
      %s205 = sphi 0, %s191
      %s209 = sphi 0, %s209
      %s211 = sphi 0, %s209
      %s212 = sphi 0, %s211
      %s226 = sphi 0, %s212
      %s230 = sphi 0, %s230
      %s232 = sphi 0, %s230
      %s233 = sphi 0, %s232
      %s247 = sphi 0, %s233
      %s251 = sphi 0, %s251
      %s253 = sphi 0, %s251
      %s254 = sphi 0, %s253
      %s268 = sphi 0, %s254
      %s272 = sphi 0, %s272
      %s274 = sphi 0, %s272
      %s275 = sphi 0, %s274
      %s289 = sphi 0, %s275
      %s293 = sphi 0, %s293
      %s295 = sphi 0, %s293
      %s296 = sphi 0, %s295
      %s310 = sphi 0, %s296
      %s314 = sphi 0, %s314
      %s316 = sphi 0, %s314
      %s317 = sphi 0, %s316
      %s331 = sphi 0, %s317
      %s335 = sphi 0, %s335
      %s337 = sphi 0, %s335
      %s338 = sphi 0, %s337
      %s352 = sphi 0, %s338
      %s356 = sphi 0, %s356
      %s358 = sphi 0, %s356
      %s359 = sphi 0, %s358
      %s373 = sphi 0, %s359
      %s377 = sphi 0, %s377
      %s379 = sphi 0, %s377
      %s380 = sphi 0, %s379
      %s394 = sphi 0, %s380
      %s400 = sphi 0, %s402
      %s403 = sphi 0, %s400
      %s404 = sphi 0, %s403
      %s420 = sphi 0, %s404
    $region4: #{tpu_custom_call.1} parent=1 // loop_header_branch
      %37 = sbr.rel (%p35) target = $region8
    $region5: #{tpu_custom_call.1} parent=1 // loop_body
      %s39 = ssub.s32 %s34, 1
      %s40 = ssub.s32 %s34, 2
      %s41 = sadd.s32 %s34, 1
      %s42 = ssub.s32 %s34, %s41
      %p43 = scmp.eq.s32.totalorder %s42, 0
      %s45 = sadd.s32 %s44, 1
      %s46 = scalar_select %p43, %s44, %s45
      %p49 = pneg %p43
      %p50 = scmp.eq.s32.totalorder %s34, 1
      %p51 = por %p49, %p50
      %p52 = scmp.ne.s32.totalorder %s44, %s47
      %p53 = scmp.eq.s32.totalorder %s34, 0
      %p54 = por %p52, %p53
      %p55 = scmp.ne.s32.totalorder %s44, %s47
      %p56 = scmp.eq.s32.totalorder %s39, 1
      %p57 = por %p55, %p56
      %p58 = scmp.ne.s32.totalorder %s47, %s48
      %p59 = scmp.eq.s32.totalorder %s39, 0
      %p60 = por %p58, %p59
      %p61 = scmp.ne.s32.totalorder %s47, %s48
      %p62 = scmp.eq.s32.totalorder %s40, 1
      %p63 = por %p61, %p62
      %p65 = scmp.ne.s32.totalorder %s48, %s64
      %p66 = scmp.eq.s32.totalorder %s40, 0
      %p67 = por %p65, %p66
      %s68 = ssub.s32 %s34, %s41
      %p69 = scmp.eq.s32.totalorder %s68, 0
      %s71 = sadd.s32 %s70, 1
      %s72 = scalar_select %p69, %s70, %s71
      %p75 = pneg %p69
      %p76 = scmp.eq.s32.totalorder %s34, 1
      %p77 = por %p75, %p76
      %p78 = scmp.ne.s32.totalorder %s70, %s73
      %p79 = scmp.eq.s32.totalorder %s34, 0
      %p80 = por %p78, %p79
      %p81 = scmp.ne.s32.totalorder %s70, %s73
      %p82 = scmp.eq.s32.totalorder %s39, 1
      %p83 = por %p81, %p82
      %p84 = scmp.ne.s32.totalorder %s73, %s74
      %p85 = scmp.eq.s32.totalorder %s39, 0
      %p86 = por %p84, %p85
      %p87 = scmp.ne.s32.totalorder %s73, %s74
      %p88 = scmp.eq.s32.totalorder %s40, 1
      %p89 = por %p87, %p88
      %p91 = scmp.ne.s32.totalorder %s74, %s90
      %p92 = scmp.eq.s32.totalorder %s40, 0
      %p93 = por %p91, %p92
      %s94 = ssub.s32 %s34, %s41
      %p95 = scmp.eq.s32.totalorder %s94, 0
      %s97 = sadd.s32 %s96, 1
      %s98 = scalar_select %p95, %s96, %s97
      %p101 = pneg %p95
      %p102 = scmp.eq.s32.totalorder %s34, 1
      %p103 = por %p101, %p102
      %p104 = scmp.ne.s32.totalorder %s96, %s99
      %p105 = scmp.eq.s32.totalorder %s34, 0
      %p106 = por %p104, %p105
      %p107 = scmp.ne.s32.totalorder %s96, %s99
      %p108 = scmp.eq.s32.totalorder %s39, 1
      %p109 = por %p107, %p108
      %p110 = scmp.ne.s32.totalorder %s99, %s100
      %p111 = scmp.eq.s32.totalorder %s39, 0
      %p112 = por %p110, %p111
      %p113 = scmp.ne.s32.totalorder %s99, %s100
      %p114 = scmp.eq.s32.totalorder %s40, 1
      %p115 = por %p113, %p114
      %p117 = scmp.ne.s32.totalorder %s100, %s116
      %p118 = scmp.eq.s32.totalorder %s40, 0
      %p119 = por %p117, %p118
      %s120 = ssub.s32 %s34, %s41
      %p121 = scmp.eq.s32.totalorder %s120, 0
      %s123 = sadd.s32 %s122, 1
      %s124 = scalar_select %p121, %s122, %s123
      %p127 = pneg %p121
      %p128 = scmp.eq.s32.totalorder %s34, 1
      %p129 = por %p127, %p128
      %p130 = scmp.ne.s32.totalorder %s122, %s125
      %p131 = scmp.eq.s32.totalorder %s34, 0
      %p132 = por %p130, %p131
      %p133 = scmp.ne.s32.totalorder %s122, %s125
      %p134 = scmp.eq.s32.totalorder %s39, 1
      %p135 = por %p133, %p134
      %p136 = scmp.ne.s32.totalorder %s125, %s126
      %p137 = scmp.eq.s32.totalorder %s39, 0
      %p138 = por %p136, %p137
      %p139 = scmp.ne.s32.totalorder %s125, %s126
      %p140 = scmp.eq.s32.totalorder %s40, 1
      %p141 = por %p139, %p140
      %p143 = scmp.ne.s32.totalorder %s126, %s142
      %p144 = scmp.eq.s32.totalorder %s40, 0
      %p145 = por %p143, %p144
      %s147 = sadd.s32 %s146, 1
      %p150 = scmp.eq.s32.totalorder %s34, 1
      %p151 = scmp.ne.s32.totalorder %s146, %s148
      %p152 = scmp.eq.s32.totalorder %s34, 0
      %p153 = por %p151, %p152
      %p154 = scmp.ne.s32.totalorder %s146, %s148
      %p155 = scmp.eq.s32.totalorder %s39, 1
      %p156 = por %p154, %p155
      %p157 = scmp.ne.s32.totalorder %s148, %s149
      %p158 = scmp.eq.s32.totalorder %s39, 0
      %p159 = por %p157, %p158
      %p160 = scmp.ne.s32.totalorder %s148, %s149
      %p161 = scmp.eq.s32.totalorder %s40, 1
      %p162 = por %p160, %p161
      %p164 = scmp.ne.s32.totalorder %s149, %s163
      %p165 = scmp.eq.s32.totalorder %s40, 0
      %p166 = por %p164, %p165
      %s168 = sadd.s32 %s167, 1
      %p171 = scmp.eq.s32.totalorder %s34, 1
      %p172 = scmp.ne.s32.totalorder %s167, %s169
      %p173 = scmp.eq.s32.totalorder %s34, 0
      %p174 = por %p172, %p173
      %p175 = scmp.ne.s32.totalorder %s167, %s169
      %p176 = scmp.eq.s32.totalorder %s39, 1
      %p177 = por %p175, %p176
      %p178 = scmp.ne.s32.totalorder %s169, %s170
      %p179 = scmp.eq.s32.totalorder %s39, 0
      %p180 = por %p178, %p179
      %p181 = scmp.ne.s32.totalorder %s169, %s170
      %p182 = scmp.eq.s32.totalorder %s40, 1
      %p183 = por %p181, %p182
      %p185 = scmp.ne.s32.totalorder %s170, %s184
      %p186 = scmp.eq.s32.totalorder %s40, 0
      %p187 = por %p185, %p186
      %s189 = sadd.s32 %s188, 1
      %p192 = scmp.eq.s32.totalorder %s34, 1
      %p193 = scmp.ne.s32.totalorder %s188, %s190
      %p194 = scmp.eq.s32.totalorder %s34, 0
      %p195 = por %p193, %p194
      %p196 = scmp.ne.s32.totalorder %s188, %s190
      %p197 = scmp.eq.s32.totalorder %s39, 1
      %p198 = por %p196, %p197
      %p199 = scmp.ne.s32.totalorder %s190, %s191
      %p200 = scmp.eq.s32.totalorder %s39, 0
      %p201 = por %p199, %p200
      %p202 = scmp.ne.s32.totalorder %s190, %s191
      %p203 = scmp.eq.s32.totalorder %s40, 1
      %p204 = por %p202, %p203
      %p206 = scmp.ne.s32.totalorder %s191, %s205
      %p207 = scmp.eq.s32.totalorder %s40, 0
      %p208 = por %p206, %p207
      %s210 = sadd.s32 %s209, 1
      %p213 = scmp.eq.s32.totalorder %s34, 1
      %p214 = scmp.ne.s32.totalorder %s209, %s211
      %p215 = scmp.eq.s32.totalorder %s34, 0
      %p216 = por %p214, %p215
      %p217 = scmp.ne.s32.totalorder %s209, %s211
      %p218 = scmp.eq.s32.totalorder %s39, 1
      %p219 = por %p217, %p218
      %p220 = scmp.ne.s32.totalorder %s211, %s212
      %p221 = scmp.eq.s32.totalorder %s39, 0
      %p222 = por %p220, %p221
      %p223 = scmp.ne.s32.totalorder %s211, %s212
      %p224 = scmp.eq.s32.totalorder %s40, 1
      %p225 = por %p223, %p224
      %p227 = scmp.ne.s32.totalorder %s212, %s226
      %p228 = scmp.eq.s32.totalorder %s40, 0
      %p229 = por %p227, %p228
      %s231 = sadd.s32 %s230, 1
      %p234 = scmp.eq.s32.totalorder %s34, 1
      %p235 = scmp.ne.s32.totalorder %s230, %s232
      %p236 = scmp.eq.s32.totalorder %s34, 0
      %p237 = por %p235, %p236
      %p238 = scmp.ne.s32.totalorder %s230, %s232
      %p239 = scmp.eq.s32.totalorder %s39, 1
      %p240 = por %p238, %p239
      %p241 = scmp.ne.s32.totalorder %s232, %s233
      %p242 = scmp.eq.s32.totalorder %s39, 0
      %p243 = por %p241, %p242
      %p244 = scmp.ne.s32.totalorder %s232, %s233
      %p245 = scmp.eq.s32.totalorder %s40, 1
      %p246 = por %p244, %p245
      %p248 = scmp.ne.s32.totalorder %s233, %s247
      %p249 = scmp.eq.s32.totalorder %s40, 0
      %p250 = por %p248, %p249
      %s252 = sadd.s32 %s251, 1
      %p255 = scmp.eq.s32.totalorder %s34, 1
      %p256 = scmp.ne.s32.totalorder %s251, %s253
      %p257 = scmp.eq.s32.totalorder %s34, 0
      %p258 = por %p256, %p257
      %p259 = scmp.ne.s32.totalorder %s251, %s253
      %p260 = scmp.eq.s32.totalorder %s39, 1
      %p261 = por %p259, %p260
      %p262 = scmp.ne.s32.totalorder %s253, %s254
      %p263 = scmp.eq.s32.totalorder %s39, 0
      %p264 = por %p262, %p263
      %p265 = scmp.ne.s32.totalorder %s253, %s254
      %p266 = scmp.eq.s32.totalorder %s40, 1
      %p267 = por %p265, %p266
      %p269 = scmp.ne.s32.totalorder %s254, %s268
      %p270 = scmp.eq.s32.totalorder %s40, 0
      %p271 = por %p269, %p270
      %s273 = sadd.s32 %s272, 1
      %p276 = scmp.eq.s32.totalorder %s34, 1
      %p277 = scmp.ne.s32.totalorder %s272, %s274
      %p278 = scmp.eq.s32.totalorder %s34, 0
      %p279 = por %p277, %p278
      %p280 = scmp.ne.s32.totalorder %s272, %s274
      %p281 = scmp.eq.s32.totalorder %s39, 1
      %p282 = por %p280, %p281
      %p283 = scmp.ne.s32.totalorder %s274, %s275
      %p284 = scmp.eq.s32.totalorder %s39, 0
      %p285 = por %p283, %p284
      %p286 = scmp.ne.s32.totalorder %s274, %s275
      %p287 = scmp.eq.s32.totalorder %s40, 1
      %p288 = por %p286, %p287
      %p290 = scmp.ne.s32.totalorder %s275, %s289
      %p291 = scmp.eq.s32.totalorder %s40, 0
      %p292 = por %p290, %p291
      %s294 = sadd.s32 %s293, 1
      %p297 = scmp.eq.s32.totalorder %s34, 1
      %p298 = scmp.ne.s32.totalorder %s293, %s295
      %p299 = scmp.eq.s32.totalorder %s34, 0
      %p300 = por %p298, %p299
      %p301 = scmp.ne.s32.totalorder %s293, %s295
      %p302 = scmp.eq.s32.totalorder %s39, 1
      %p303 = por %p301, %p302
      %p304 = scmp.ne.s32.totalorder %s295, %s296
      %p305 = scmp.eq.s32.totalorder %s39, 0
      %p306 = por %p304, %p305
      %p307 = scmp.ne.s32.totalorder %s295, %s296
      %p308 = scmp.eq.s32.totalorder %s40, 1
      %p309 = por %p307, %p308
      %p311 = scmp.ne.s32.totalorder %s296, %s310
      %p312 = scmp.eq.s32.totalorder %s40, 0
      %p313 = por %p311, %p312
      %s315 = sadd.s32 %s314, 1
      %p318 = scmp.eq.s32.totalorder %s34, 1
      %p319 = scmp.ne.s32.totalorder %s314, %s316
      %p320 = scmp.eq.s32.totalorder %s34, 0
      %p321 = por %p319, %p320
      %p322 = scmp.ne.s32.totalorder %s314, %s316
      %p323 = scmp.eq.s32.totalorder %s39, 1
      %p324 = por %p322, %p323
      %p325 = scmp.ne.s32.totalorder %s316, %s317
      %p326 = scmp.eq.s32.totalorder %s39, 0
      %p327 = por %p325, %p326
      %p328 = scmp.ne.s32.totalorder %s316, %s317
      %p329 = scmp.eq.s32.totalorder %s40, 1
      %p330 = por %p328, %p329
      %p332 = scmp.ne.s32.totalorder %s317, %s331
      %p333 = scmp.eq.s32.totalorder %s40, 0
      %p334 = por %p332, %p333
      %s336 = sadd.s32 %s335, 1
      %p339 = scmp.eq.s32.totalorder %s34, 1
      %p340 = scmp.ne.s32.totalorder %s335, %s337
      %p341 = scmp.eq.s32.totalorder %s34, 0
      %p342 = por %p340, %p341
      %p343 = scmp.ne.s32.totalorder %s335, %s337
      %p344 = scmp.eq.s32.totalorder %s39, 1
      %p345 = por %p343, %p344
      %p346 = scmp.ne.s32.totalorder %s337, %s338
      %p347 = scmp.eq.s32.totalorder %s39, 0
      %p348 = por %p346, %p347
      %p349 = scmp.ne.s32.totalorder %s337, %s338
      %p350 = scmp.eq.s32.totalorder %s40, 1
      %p351 = por %p349, %p350
      %p353 = scmp.ne.s32.totalorder %s338, %s352
      %p354 = scmp.eq.s32.totalorder %s40, 0
      %p355 = por %p353, %p354
      %s357 = sadd.s32 %s356, 1
      %p360 = scmp.eq.s32.totalorder %s34, 1
      %p361 = scmp.ne.s32.totalorder %s356, %s358
      %p362 = scmp.eq.s32.totalorder %s34, 0
      %p363 = por %p361, %p362
      %p364 = scmp.ne.s32.totalorder %s356, %s358
      %p365 = scmp.eq.s32.totalorder %s39, 1
      %p366 = por %p364, %p365
      %p367 = scmp.ne.s32.totalorder %s358, %s359
      %p368 = scmp.eq.s32.totalorder %s39, 0
      %p369 = por %p367, %p368
      %p370 = scmp.ne.s32.totalorder %s358, %s359
      %p371 = scmp.eq.s32.totalorder %s40, 1
      %p372 = por %p370, %p371
      %p374 = scmp.ne.s32.totalorder %s359, %s373
      %p375 = scmp.eq.s32.totalorder %s40, 0
      %p376 = por %p374, %p375
      %s378 = sadd.s32 %s377, 1
      %p381 = scmp.eq.s32.totalorder %s34, 1
      %p382 = scmp.ne.s32.totalorder %s377, %s379
      %p383 = scmp.eq.s32.totalorder %s34, 0
      %p384 = por %p382, %p383
      %p385 = scmp.ne.s32.totalorder %s377, %s379
      %p386 = scmp.eq.s32.totalorder %s39, 1
      %p387 = por %p385, %p386
      %p388 = scmp.ne.s32.totalorder %s379, %s380
      %p389 = scmp.eq.s32.totalorder %s39, 0
      %p390 = por %p388, %p389
      %p391 = scmp.ne.s32.totalorder %s379, %s380
      %p392 = scmp.eq.s32.totalorder %s40, 1
      %p393 = por %p391, %p392
      %p395 = scmp.ne.s32.totalorder %s380, %s394
      %p396 = scmp.eq.s32.totalorder %s40, 0
      %p397 = por %p395, %p396
      %s398 = ssub.s32 %s34, %s41
      %p399 = scmp.eq.s32.totalorder %s398, 0
      %s401 = sadd.s32 %s400, 1
      %s402 = scalar_select %p399, %s400, %s401
      %p405 = pneg %p399
      %p406 = scmp.eq.s32.totalorder %s34, 1
      %p407 = por %p405, %p406
      %p408 = scmp.ne.s32.totalorder %s400, %s403
      %p409 = scmp.eq.s32.totalorder %s34, 0
      %p410 = por %p408, %p409
      %p411 = scmp.ne.s32.totalorder %s400, %s403
      %p412 = scmp.eq.s32.totalorder %s39, 1
      %p413 = por %p411, %p412
      %p414 = scmp.ne.s32.totalorder %s403, %s404
      %p415 = scmp.eq.s32.totalorder %s39, 0
      %p416 = por %p414, %p415
      %p417 = scmp.ne.s32.totalorder %s403, %s404
      %p418 = scmp.eq.s32.totalorder %s40, 1
      %p419 = por %p417, %p418
      %p421 = scmp.ne.s32.totalorder %s404, %s420
      %p422 = scmp.eq.s32.totalorder %s40, 0
      %p423 = por %p421, %p422
      %p424 = scmp.le.s32.totalorder 1, %s34
      %p425 = scmp.lt.s32.totalorder %s34, 3
      %p426 = pnand %p424, %p425
      %p427 = pneg %p426
      // Predicated region
      $region9: #{tpu_custom_call.1} parent=5 // pred_check
        _
      $region10: #{tpu_custom_call.1} parent=5 // pred_check_branch
        %429 = sbr.rel (%p426) target = $region12
      $region11: #{tpu_custom_call.1} parent=5 // pred_region
        %s430 = ssub.s32 %s34, 1
        // Predicated region
        $region13: #{tpu_custom_call.1} parent=11 // pred_check
          %p431 = pneg %p159
        $region14: #{tpu_custom_call.1} parent=11 // pred_check_branch
          %433 = sbr.rel (%p431) target = $region16
        $region15: #{tpu_custom_call.1} parent=11 // pred_region
          %s435 = ssub.s32 512, 512
          %436 = vsyncadd [#allocation9], %s435
          %s437 = sshll.u32 [#allocation8], 4
          %s438 = int_to_ptr.vmem [resolvable:$true] %s437
          %443 = dma.hbm_to_vmem [thread:$0]  %s4, 512, %s438, [#allocation9], 128, 128, 8
        $region16: #{tpu_custom_call.1} parent=11 // pred_fallthru
          _
        // Predicated region
        $region17: #{tpu_custom_call.1} parent=11 // pred_check
          %p444 = pneg %p180
        $region18: #{tpu_custom_call.1} parent=11 // pred_check_branch
          %446 = sbr.rel (%p444) target = $region20
        $region19: #{tpu_custom_call.1} parent=11 // pred_region
          _
        $region20: #{tpu_custom_call.1} parent=11 // pred_fallthru
          _
        // Predicated region
        $region21: #{tpu_custom_call.1} parent=11 // pred_check
          %p447 = pneg %p201
        $region22: #{tpu_custom_call.1} parent=11 // pred_check_branch
          %449 = sbr.rel (%p447) target = $region24
        $region23: #{tpu_custom_call.1} parent=11 // pred_region
          %s451 = ssub.s32 512, 512
          %452 = vsyncadd [#allocation9], %s451
          %s453 = sshll.u32 [#allocation10], 4
          %s454 = int_to_ptr.vmem [resolvable:$true] %s453
          %459 = dma.hbm_to_vmem [thread:$0]  %s6, 512, %s454, [#allocation9], 128, 128, 8
        $region24: #{tpu_custom_call.1} parent=11 // pred_fallthru
          _
        // Predicated region
        $region25: #{tpu_custom_call.1} parent=11 // pred_check
          %p460 = pneg %p222
        $region26: #{tpu_custom_call.1} parent=11 // pred_check_branch
          %462 = sbr.rel (%p460) target = $region28
        $region27: #{tpu_custom_call.1} parent=11 // pred_region
          _
        $region28: #{tpu_custom_call.1} parent=11 // pred_fallthru
          _
        // Predicated region
        $region29: #{tpu_custom_call.1} parent=11 // pred_check
          %p463 = pneg %p243
        $region30: #{tpu_custom_call.1} parent=11 // pred_check_branch
          %465 = sbr.rel (%p463) target = $region32
        $region31: #{tpu_custom_call.1} parent=11 // pred_region
          %s467 = ssub.s32 128, 128
          %468 = vsyncadd [#allocation12], %s467
          %s470 = sshll.u32 [#allocation11], 4
          %s471 = int_to_ptr.vmem [resolvable:$true] %s470
          %473 = dma.hbm_to_vmem [thread:$0]  %s8, 128, %s471, [#allocation12]
        $region32: #{tpu_custom_call.1} parent=11 // pred_fallthru
          _
        // Predicated region
        $region33: #{tpu_custom_call.1} parent=11 // pred_check
          %p474 = pneg %p264
        $region34: #{tpu_custom_call.1} parent=11 // pred_check_branch
          %476 = sbr.rel (%p474) target = $region36
        $region35: #{tpu_custom_call.1} parent=11 // pred_region
          _
        $region36: #{tpu_custom_call.1} parent=11 // pred_fallthru
          _
        // Predicated region
        $region37: #{tpu_custom_call.1} parent=11 // pred_check
          %p477 = pneg %p285
        $region38: #{tpu_custom_call.1} parent=11 // pred_check_branch
          %479 = sbr.rel (%p477) target = $region40
        $region39: #{tpu_custom_call.1} parent=11 // pred_region
          _
        $region40: #{tpu_custom_call.1} parent=11 // pred_fallthru
          _
        // Predicated region
        $region41: #{tpu_custom_call.1} parent=11 // pred_check
          %p480 = pneg %p306
        $region42: #{tpu_custom_call.1} parent=11 // pred_check_branch
          %482 = sbr.rel (%p480) target = $region44
        $region43: #{tpu_custom_call.1} parent=11 // pred_region
          %s484 = ssub.s32 512, 512
          %485 = vsyncadd [#allocation12], %s484
          %s486 = sshll.u32 [#allocation13], 4
          %s487 = int_to_ptr.vmem [resolvable:$true] %s486
          %492 = dma.hbm_to_vmem [thread:$0]  %s11, 512, %s487, [#allocation12], 128, 128, 8
        $region44: #{tpu_custom_call.1} parent=11 // pred_fallthru
          _
        // Predicated region
        $region45: #{tpu_custom_call.1} parent=11 // pred_check
          %p493 = pneg %p327
        $region46: #{tpu_custom_call.1} parent=11 // pred_check_branch
          %495 = sbr.rel (%p493) target = $region48
        $region47: #{tpu_custom_call.1} parent=11 // pred_region
          %s497 = ssub.s32 512, 512
          %498 = vsyncadd [#allocation15], %s497
          %s499 = sshll.u32 [#allocation14], 4
          %s500 = int_to_ptr.vmem [resolvable:$true] %s499
          %505 = dma.hbm_to_vmem [thread:$0]  %s12, 512, %s500, [#allocation15], 128, 128, 8
        $region48: #{tpu_custom_call.1} parent=11 // pred_fallthru
          _
        // Predicated region
        $region49: #{tpu_custom_call.1} parent=11 // pred_check
          %p506 = pneg %p348
        $region50: #{tpu_custom_call.1} parent=11 // pred_check_branch
          %508 = sbr.rel (%p506) target = $region52
        $region51: #{tpu_custom_call.1} parent=11 // pred_region
          _
        $region52: #{tpu_custom_call.1} parent=11 // pred_fallthru
          _
        // Predicated region
        $region53: #{tpu_custom_call.1} parent=11 // pred_check
          %p509 = pneg %p369
        $region54: #{tpu_custom_call.1} parent=11 // pred_check_branch
          %511 = sbr.rel (%p509) target = $region56
        $region55: #{tpu_custom_call.1} parent=11 // pred_region
          _
        $region56: #{tpu_custom_call.1} parent=11 // pred_fallthru
          _
        // Predicated region
        $region57: #{tpu_custom_call.1} parent=11 // pred_check
          %p512 = pneg %p390
        $region58: #{tpu_custom_call.1} parent=11 // pred_check_branch
          %514 = sbr.rel (%p512) target = $region60
        $region59: #{tpu_custom_call.1} parent=11 // pred_region
          _
        $region60: #{tpu_custom_call.1} parent=11 // pred_fallthru
          _
      $region12: #{tpu_custom_call.1} parent=5 // pred_fallthru
        _
      %p515 = scmp.lt.s32.totalorder %s34, 2
      // Predicated region
      $region61: #{tpu_custom_call.1} parent=5 // pred_check
        %p516 = pneg %p515
      $region62: #{tpu_custom_call.1} parent=5 // pred_check_branch
        %518 = sbr.rel (%p516) target = $region64
      $region63: #{tpu_custom_call.1} parent=5 // pred_region
        // Predicated region
        $region65: #{tpu_custom_call.1} parent=63 // pred_check
          %p519 = pneg %p54
        $region66: #{tpu_custom_call.1} parent=63 // pred_check_branch
          %521 = sbr.rel (%p519) target = $region68
        $region67: #{tpu_custom_call.1} parent=63 // pred_region
          %s522 = sand.u32 %s44, 1
          %s523 = scalar_lea.sflag [#allocation3], %s522
          %s524 = sand.u32 %s44, 1
          %s525 = smul.addr %s524, 8
          %s526 = scalar_lea.vmem [#allocation2], %s525
          %s528 = ssub.s32 128, 128
          %529 = vsyncadd %s523, %s528
          %s530 = smul.addr %s34, 128
          %s531 = scalar_lea.hbm %s0, %s530
          %s533 = sshll.u32 %s526, 4
          %s534 = int_to_ptr.vmem [resolvable:$true] %s533
          %536 = dma.hbm_to_vmem [thread:$0]  %s531, 128, %s534, %s523
        $region68: #{tpu_custom_call.1} parent=63 // pred_fallthru
          _
        // Predicated region
        $region69: #{tpu_custom_call.1} parent=63 // pred_check
          %p537 = pneg %p80
        $region70: #{tpu_custom_call.1} parent=63 // pred_check_branch
          %539 = sbr.rel (%p537) target = $region72
        $region71: #{tpu_custom_call.1} parent=63 // pred_region
          %s540 = sand.u32 %s34, 1
          %s541 = scalar_lea.sflag [#allocation6], %s540
          %s542 = sand.u32 %s70, 1
          %s543 = smul.addr %s542, 8
          %s544 = scalar_lea.vmem [#allocation5], %s543
          %s546 = ssub.s32 128, 128
          %547 = vsyncadd %s541, %s546
          %s548 = smul.addr %s34, 128
          %s549 = scalar_lea.hbm %s1, %s548
          %s551 = sshll.u32 %s544, 4
          %s552 = int_to_ptr.vmem [resolvable:$true] %s551
          %554 = dma.hbm_to_vmem [thread:$0]  %s549, 128, %s552, %s541
        $region72: #{tpu_custom_call.1} parent=63 // pred_fallthru
          _
        // Predicated region
        $region73: #{tpu_custom_call.1} parent=63 // pred_check
          %p555 = pneg %p106
        $region74: #{tpu_custom_call.1} parent=63 // pred_check_branch
          %557 = sbr.rel (%p555) target = $region76
        $region75: #{tpu_custom_call.1} parent=63 // pred_region
          %p558 = scmp.lt.s32.totalorder %s34, 1
          %s559 = scalar_select %p558, %s34, 1
          %s560 = scalar_lea.vmem %s2, %s559
        $region76: #{tpu_custom_call.1} parent=63 // pred_fallthru
          _
        // Predicated region
        $region77: #{tpu_custom_call.1} parent=63 // pred_check
          %p561 = pneg %p132
        $region78: #{tpu_custom_call.1} parent=63 // pred_check_branch
          %563 = sbr.rel (%p561) target = $region80
        $region79: #{tpu_custom_call.1} parent=63 // pred_region
          %s564 = sand.u32 %s34, 1
          %s565 = scalar_lea.sflag [#allocation6], %s564
          %s566 = sand.u32 %s122, 1
          %s567 = smul.addr %s566, 40
          %s568 = scalar_lea.vmem [#allocation7], %s567
          %s570 = ssub.s32 640, 640
          %571 = vsyncadd %s565, %s570
          %s572 = smul.addr %s34, 5
          %s573 = smul.addr %s572, 128
          %s574 = scalar_lea.hbm %s3, %s573
          %s575 = sshll.u32 %s568, 4
          %s576 = int_to_ptr.vmem [resolvable:$true] %s575
          %581 = dma.hbm_to_vmem [thread:$0]  %s574, 640, %s576, %s565, 128, 128, 8
        $region80: #{tpu_custom_call.1} parent=63 // pred_fallthru
          _
      $region64: #{tpu_custom_call.1} parent=5 // pred_fallthru
        _
      %p582 = scmp.le.s32.totalorder 1, %s34
      %p583 = scmp.lt.s32.totalorder %s34, 3
      %p584 = pnand %p582, %p583
      %p585 = pneg %p584
      // Predicated region
      $region81: #{tpu_custom_call.1} parent=5 // pred_check
        _
      $region82: #{tpu_custom_call.1} parent=5 // pred_check_branch
        %587 = sbr.rel (%p584) target = $region84
      $region83: #{tpu_custom_call.1} parent=5 // pred_region
        %s588 = ssub.s32 %s34, 1
        %s589 = sand.u32 %s47, 1
        %s590 = scalar_lea.sflag [#allocation3], %s589
        %s591 = sand.u32 %s47, 1
        %s592 = smul.addr %s591, 8
        %s593 = scalar_lea.vmem [#allocation2], %s592
        // Predicated region
        $region85: #{tpu_custom_call.1} parent=83 // pred_check
          %p594 = pneg %p60
        $region86: #{tpu_custom_call.1} parent=83 // pred_check_branch
          %596 = sbr.rel (%p594) target = $region88
        $region87: #{tpu_custom_call.1} parent=83 // pred_region
          %597 = dma.done %s590, 128
        $region88: #{tpu_custom_call.1} parent=83 // pred_fallthru
          _
        %s598 = sand.u32 %s39, 1
        %s599 = scalar_lea.sflag [#allocation6], %s598
        %s600 = sand.u32 %s73, 1
        %s601 = smul.addr %s600, 8
        %s602 = scalar_lea.vmem [#allocation5], %s601
        // Predicated region
        $region89: #{tpu_custom_call.1} parent=83 // pred_check
          %p603 = pneg %p86
        $region90: #{tpu_custom_call.1} parent=83 // pred_check_branch
          %605 = sbr.rel (%p603) target = $region92
        $region91: #{tpu_custom_call.1} parent=83 // pred_region
          %606 = dma.done %s599, 128
        $region92: #{tpu_custom_call.1} parent=83 // pred_fallthru
          _
        %s607 = sand.u32 %s39, 1
        %s608 = scalar_lea.sflag [#allocation6], %s607
        %s609 = sand.u32 %s125, 1
        %s610 = smul.addr %s609, 40
        %s611 = scalar_lea.vmem [#allocation7], %s610
        // Predicated region
        $region93: #{tpu_custom_call.1} parent=83 // pred_check
          %p612 = pneg %p138
        $region94: #{tpu_custom_call.1} parent=83 // pred_check_branch
          %614 = sbr.rel (%p612) target = $region96
        $region95: #{tpu_custom_call.1} parent=83 // pred_region
          %615 = dma.done %s608, 640
        $region96: #{tpu_custom_call.1} parent=83 // pred_fallthru
          _
        // Predicated region
        $region97: #{tpu_custom_call.1} parent=83 // pred_check
          %p616 = pneg %p159
        $region98: #{tpu_custom_call.1} parent=83 // pred_check_branch
          %618 = sbr.rel (%p616) target = $region100
        $region99: #{tpu_custom_call.1} parent=83 // pred_region
          %619 = dma.done [#allocation9], 512
        $region100: #{tpu_custom_call.1} parent=83 // pred_fallthru
          _
        // Predicated region
        $region101: #{tpu_custom_call.1} parent=83 // pred_check
          %p620 = pneg %p201
        $region102: #{tpu_custom_call.1} parent=83 // pred_check_branch
          %622 = sbr.rel (%p620) target = $region104
        $region103: #{tpu_custom_call.1} parent=83 // pred_region
          %623 = dma.done [#allocation9], 512
        $region104: #{tpu_custom_call.1} parent=83 // pred_fallthru
          _
        // Predicated region
        $region105: #{tpu_custom_call.1} parent=83 // pred_check
          %p624 = pneg %p243
        $region106: #{tpu_custom_call.1} parent=83 // pred_check_branch
          %626 = sbr.rel (%p624) target = $region108
        $region107: #{tpu_custom_call.1} parent=83 // pred_region
          %627 = dma.done [#allocation12], 128
        $region108: #{tpu_custom_call.1} parent=83 // pred_fallthru
          _
        // Predicated region
        $region109: #{tpu_custom_call.1} parent=83 // pred_check
          %p628 = pneg %p306
        $region110: #{tpu_custom_call.1} parent=83 // pred_check_branch
          %630 = sbr.rel (%p628) target = $region112
        $region111: #{tpu_custom_call.1} parent=83 // pred_region
          %631 = dma.done [#allocation12], 512
        $region112: #{tpu_custom_call.1} parent=83 // pred_fallthru
          _
        // Predicated region
        $region113: #{tpu_custom_call.1} parent=83 // pred_check
          %p632 = pneg %p327
        $region114: #{tpu_custom_call.1} parent=83 // pred_check_branch
          %634 = sbr.rel (%p632) target = $region116
        $region115: #{tpu_custom_call.1} parent=83 // pred_region
          %635 = dma.done [#allocation15], 512
        $region116: #{tpu_custom_call.1} parent=83 // pred_fallthru
          _
        %s636 = sand.u32 %s47, 1
        %s637 = scalar_lea.sflag [#allocation3], %s636
        %s638 = sand.u32 %s47, 1
        %s639 = smul.addr %s638, 8
        %s640 = scalar_lea.vmem [#allocation2], %s639
        %p641 = pneg %p60
        %p642 = pneg %p57
        %s643 = sand.u32 %s39, 1
        %s644 = scalar_lea.sflag [#allocation6], %s643
        %s645 = sand.u32 %s73, 1
        %s646 = smul.addr %s645, 8
        %s647 = scalar_lea.vmem [#allocation5], %s646
        %p648 = pneg %p86
        %p649 = pneg %p83
        %p650 = scmp.lt.s32.totalorder %s39, 1
        %s651 = scalar_select %p650, %s39, 1
        %s652 = scalar_lea.vmem %s2, %s651
        %p653 = pneg %p112
        %p654 = pneg %p109
        %s655 = sand.u32 %s39, 1
        %s656 = scalar_lea.sflag [#allocation6], %s655
        %s657 = sand.u32 %s125, 1
        %s658 = smul.addr %s657, 40
        %s659 = scalar_lea.vmem [#allocation7], %s658
        %p660 = pneg %p138
        %p661 = pneg %p135
        %p662 = pneg %p159
        %p663 = pneg %p156
        %p664 = pneg %p180
        %p665 = pneg %p177
        %p666 = pneg %p201
        %p667 = pneg %p198
        %p668 = pneg %p222
        %p669 = pneg %p219
        %p670 = pneg %p243
        %p671 = pneg %p240
        %p672 = pneg %p264
        %p673 = pneg %p261
        %p674 = pneg %p285
        %p675 = pneg %p282
        %p676 = pneg %p306
        %p677 = pneg %p303
        %p678 = pneg %p327
        %p679 = pneg %p324
        %p680 = pneg %p348
        %p681 = pneg %p345
        %p682 = pneg %p369
        %p683 = pneg %p366
        %p684 = pneg %p390
        %p685 = pneg %p387
        %p686 = pneg %p416
        %p687 = pneg %p413
        %s688 = sand.u32 %s403, 1
        %s689 = scalar_lea.sflag [#allocation4], %s688
        %s690 = sand.u32 %s403, 1
        %s691 = smul.addr %s690, 8
        %s692 = scalar_lea.vmem [#allocation16], %s691
        %p693 = scmp.lt.s32.totalorder %s39, 1
        %s694 = scalar_select %p693, %s39, 1
        %s695 = scalar_lea.vmem %s2, %s694
        %v696 = vld [vmem:[%s593] sm:$0xff]
        %v697 = vld [vmem:[%s602] sm:$0xff]
        %v698 = vadd.f32 %v696, %v697
        %v699 = vld [vmem:[#allocation8] sm:$0xff]
        %v700 = vld [vmem:[#allocation8 + $0x8] sm:$0xff]
        %v701 = vld [vmem:[#allocation8 + $0x10] sm:$0xff]
        %v702 = vld [vmem:[#allocation8 + $0x18] sm:$0xff]
        %v703 = vld [vmem:[%s5] sm:$0x1]
        %v705 = vlaneseq
        %v706 = vshrl.u32 %v705, 7
        %v707 = vsub.s32 0, %v706
        %v708 = vrot.slane %v703, %v707
        %vm710 = vcmask 261120
        %v712 = vsel %vm710, %v698, 0
        %714 = vmatprep.subr.mxu0 0.0
        %715 = vmatpush1.msra.mxu0 %v699
        %716 = vmatprep.subr.mxu0 0.0
        %717 = vmatpush1.msra.mxu0 %v700
        %718 = vmatprep.subr.mxu0 0.0
        %719 = vmatpush1.msra.mxu0 %v701
        %720 = vmatprep.subr.mxu0 0.0
        %721 = vmatpush1.msra.mxu0 %v702
        %722 = vmatprep.subr.mxu0 0.0
        %723 = vmatpush1.msra.mxu0 0.0
        %724 = vmatprep.subr.mxu0 0.0
        %725 = vmatpush1.msra.mxu0 0.0
        %726 = vmatprep.subr.mxu0 0.0
        %727 = vmatpush1.msra.mxu0 0.0
        %728 = vmatprep.subr.mxu0 0.0
        %729 = vmatpush1.msra.mxu0 0.0
        %730 = vmatprep.subr.mxu0 0.0
        %731 = vmatpush1.msra.mxu0 0.0
        %732 = vmatprep.subr.mxu0 0.0
        %733 = vmatpush1.msra.mxu0 0.0
        %734 = vmatprep.subr.mxu0 0.0
        %735 = vmatpush1.msra.mxu0 0.0
        %736 = vmatprep.subr.mxu0 0.0
        %737 = vmatpush1.msra.mxu0 0.0
        %738 = vmatprep.subr.mxu0 0.0
        %739 = vmatpush1.msra.mxu0 0.0
        %740 = vmatprep.subr.mxu0 0.0
        %741 = vmatpush1.msra.mxu0 0.0
        %742 = vmatprep.subr.mxu0 0.0
        %743 = vmatpush1.msra.mxu0 0.0
        %744 = vmatprep.subr.mxu0 0.0
        %745 = vmatpush1.msra.mxu0 0.0
        %746 = vmatprep.subr.mxu0 0.0
        %747 = vmatpush1.msra.mxu0 0.0
        %748 = vmatprep.subr.mxu0 0.0
        %749 = vmatpush1.msra.mxu0 0.0
        %750 = vmatprep.subr.mxu0 0.0
        %751 = vmatpush1.msra.mxu0 0.0
        %752 = vmatprep.subr.mxu0 0.0
        %753 = vmatpush1.msra.mxu0 0.0
        %754 = vmatprep.subr.mxu0 0.0
        %755 = vmatpush1.msra.mxu0 0.0
        %756 = vmatprep.subr.mxu0 0.0
        %757 = vmatpush1.msra.mxu0 0.0
        %758 = vmatprep.subr.mxu0 0.0
        %759 = vmatpush1.msra.mxu0 0.0
        %760 = vmatprep.subr.mxu0 0.0
        %761 = vmatpush1.msra.mxu0 0.0
        %762 = vmatprep.subr.mxu0 0.0
        %763 = vmatpush1.msra.mxu0 0.0
        %764 = vmatprep.subr.mxu0 0.0
        %765 = vmatpush1.msra.mxu0 0.0
        %766 = vmatprep.subr.mxu0 0.0
        %767 = vmatpush1.msra.mxu0 0.0
        %768 = vmatprep.subr.mxu0 0.0
        %769 = vmatpush1.msra.mxu0 0.0
        %770 = vmatprep.subr.mxu0 0.0
        %771 = vmatpush1.msra.mxu0 0.0
        %772 = vmatprep.subr.mxu0 0.0
        %773 = vmatpush1.msra.mxu0 0.0
        %774 = vmatprep.subr.mxu0 0.0
        %775 = vmatpush1.msra.mxu0 0.0
        %776 = vmatprep.subr.mxu0 0.0
        %777 = vmatpush1.msra.mxu0 0.0
        %778 = vmatprep.mubr.f32.mxu0 0.0
        %779 = vmatmul.mubr.f32.gmra.mrb[0].mxu0 %v712
        %v780 = vpop.f32.mrb[0].mxu0
        %v781 = vadd.f32 %v708, %v780
        %v782 = vpop.f32.mrb[0].mxu0
        %783 = vdwg.mxu0
        %v784 = vld [vmem:[#allocation10] sm:$0xff]
        %v785 = vld [vmem:[#allocation10 + $0x8] sm:$0xff]
        %v786 = vld [vmem:[#allocation10 + $0x10] sm:$0xff]
        %v787 = vld [vmem:[#allocation10 + $0x18] sm:$0xff]
        %v788 = vld [vmem:[%s7] sm:$0x1]
        %v790 = vlaneseq
        %v791 = vshrl.u32 %v790, 7
        %v792 = vsub.s32 0, %v791
        %v793 = vrot.slane %v788, %v792
        %v796 = vsel %vm710, %v696, 0
        %798 = vmatprep.subr.mxu0 0.0
        %799 = vmatpush1.msra.mxu0 %v784
        %800 = vmatprep.subr.mxu0 0.0
        %801 = vmatpush1.msra.mxu0 %v785
        %802 = vmatprep.subr.mxu0 0.0
        %803 = vmatpush1.msra.mxu0 %v786
        %804 = vmatprep.subr.mxu0 0.0
        %805 = vmatpush1.msra.mxu0 %v787
        %806 = vmatprep.subr.mxu0 0.0
        %807 = vmatpush1.msra.mxu0 0.0
        %808 = vmatprep.subr.mxu0 0.0
        %809 = vmatpush1.msra.mxu0 0.0
        %810 = vmatprep.subr.mxu0 0.0
        %811 = vmatpush1.msra.mxu0 0.0
        %812 = vmatprep.subr.mxu0 0.0
        %813 = vmatpush1.msra.mxu0 0.0
        %814 = vmatprep.subr.mxu0 0.0
        %815 = vmatpush1.msra.mxu0 0.0
        %816 = vmatprep.subr.mxu0 0.0
        %817 = vmatpush1.msra.mxu0 0.0
        %818 = vmatprep.subr.mxu0 0.0
        %819 = vmatpush1.msra.mxu0 0.0
        %820 = vmatprep.subr.mxu0 0.0
        %821 = vmatpush1.msra.mxu0 0.0
        %822 = vmatprep.subr.mxu0 0.0
        %823 = vmatpush1.msra.mxu0 0.0
        %824 = vmatprep.subr.mxu0 0.0
        %825 = vmatpush1.msra.mxu0 0.0
        %826 = vmatprep.subr.mxu0 0.0
        %827 = vmatpush1.msra.mxu0 0.0
        %828 = vmatprep.subr.mxu0 0.0
        %829 = vmatpush1.msra.mxu0 0.0
        %830 = vmatprep.subr.mxu0 0.0
        %831 = vmatpush1.msra.mxu0 0.0
        %832 = vmatprep.subr.mxu0 0.0
        %833 = vmatpush1.msra.mxu0 0.0
        %834 = vmatprep.subr.mxu0 0.0
        %835 = vmatpush1.msra.mxu0 0.0
        %836 = vmatprep.subr.mxu0 0.0
        %837 = vmatpush1.msra.mxu0 0.0
        %838 = vmatprep.subr.mxu0 0.0
        %839 = vmatpush1.msra.mxu0 0.0
        %840 = vmatprep.subr.mxu0 0.0
        %841 = vmatpush1.msra.mxu0 0.0
        %842 = vmatprep.subr.mxu0 0.0
        %843 = vmatpush1.msra.mxu0 0.0
        %844 = vmatprep.subr.mxu0 0.0
        %845 = vmatpush1.msra.mxu0 0.0
        %846 = vmatprep.subr.mxu0 0.0
        %847 = vmatpush1.msra.mxu0 0.0
        %848 = vmatprep.subr.mxu0 0.0
        %849 = vmatpush1.msra.mxu0 0.0
        %850 = vmatprep.subr.mxu0 0.0
        %851 = vmatpush1.msra.mxu0 0.0
        %852 = vmatprep.subr.mxu0 0.0
        %853 = vmatpush1.msra.mxu0 0.0
        %854 = vmatprep.subr.mxu0 0.0
        %855 = vmatpush1.msra.mxu0 0.0
        %856 = vmatprep.subr.mxu0 0.0
        %857 = vmatpush1.msra.mxu0 0.0
        %858 = vmatprep.subr.mxu0 0.0
        %859 = vmatpush1.msra.mxu0 0.0
        %860 = vmatprep.subr.mxu0 0.0
        %861 = vmatpush1.msra.mxu0 0.0
        %862 = vmatprep.mubr.f32.mxu0 0.0
        %863 = vmatmul.mubr.f32.gmra.mrb[0].mxu0 %v796
        %v864 = vpop.f32.mrb[0].mxu0
        %v865 = vadd.f32 %v793, %v864
        %v866 = vpop.f32.mrb[0].mxu0
        %867 = vdwg.mxu0
        %v868 = vld [vmem:[%s10] sm:$0xff]
        %v869 = vld [vmem:[%s10 + $0x8] sm:$0xff]
        %v870 = vld [vmem:[%s10 + $0x10] sm:$0xff]
        %v871 = vld [vmem:[%s10 + $0x18] sm:$0xff]
        %876 = vrot.lane.b32.xlu0 %v868, 32
        %v877 = vpop.permute.xlu0 %876
        %878 = vrot.lane.b32.xlu0 %v869, 32
        %v879 = vpop.permute.xlu0 %878
        %880 = vrot.lane.b32.xlu0 %v870, 32
        %v881 = vpop.permute.xlu0 %880
        %882 = vrot.lane.b32.xlu0 %v871, 32
        %v883 = vpop.permute.xlu0 %882
        %v888 = vmul.f32 %v781, %v877
        %v889 = vmul.f32 %v781, %v879
        %v890 = vmul.f32 %v781, %v881
        %v891 = vmul.f32 %v781, %v883
        %v892 = vmul.f32 %v865, %v868
        %v893 = vmul.f32 %v865, %v869
        %v894 = vmul.f32 %v865, %v870
        %v895 = vmul.f32 %v865, %v871
        %v896 = vld [vmem:[%s611] sm:$0xff]
        %v897 = vld [vmem:[#allocation11] sm:$0x1]
        %v898 = vlaneseq
        %v899 = vshrl.u32 %v898, 7
        %v900 = vsub.s32 0, %v899
        %v901 = vrot.slane %v897, %v900
        %v902 = vmul.f32 %v896, %v901
        %s903 = scalar_lea.vmem %s611, 8 [#allocation7]
        %v904 = vld [vmem:[%s903] sm:$0xff]
        %v905 = vld [vmem:[#allocation11 + $0x1] sm:$0x1]
        %v906 = vlaneseq
        %v907 = vshrl.u32 %v906, 7
        %v908 = vsub.s32 0, %v907
        %v909 = vrot.slane %v905, %v908
        %v910 = vmul.f32 %v904, %v909
        %v911 = vadd.f32 %v902, %v910
        %s912 = scalar_lea.vmem %s611, 16 [#allocation7]
        %v913 = vld [vmem:[%s912] sm:$0xff]
        %v914 = vld [vmem:[#allocation11 + $0x2] sm:$0x1]
        %v915 = vlaneseq
        %v916 = vshrl.u32 %v915, 7
        %v917 = vsub.s32 0, %v916
        %v918 = vrot.slane %v914, %v917
        %v919 = vmul.f32 %v913, %v918
        %v920 = vadd.f32 %v911, %v919
        %s921 = scalar_lea.vmem %s611, 24 [#allocation7]
        %v922 = vld [vmem:[%s921] sm:$0xff]
        %v923 = vld [vmem:[#allocation11 + $0x3] sm:$0x1]
        %v924 = vlaneseq
        %v925 = vshrl.u32 %v924, 7
        %v926 = vsub.s32 0, %v925
        %v927 = vrot.slane %v923, %v926
        %v928 = vmul.f32 %v922, %v927
        %v929 = vadd.f32 %v920, %v928
        %s930 = scalar_lea.vmem %s611, 32 [#allocation7]
        %v931 = vld [vmem:[%s930] sm:$0xff]
        %v932 = vld [vmem:[#allocation11 + $0x4] sm:$0x1]
        %v933 = vlaneseq
        %v934 = vshrl.u32 %v933, 7
        %v935 = vsub.s32 0, %v934
        %v936 = vrot.slane %v932, %v935
        %v937 = vmul.f32 %v931, %v936
        %v938 = vadd.f32 %v929, %v937
        %v939 = vld [vmem:[%s9] sm:$0x1]
        %v941 = vlaneseq
        %v942 = vshrl.u32 %v941, 7
        %v943 = vsub.s32 0, %v942
        %v944 = vrot.slane %v939, %v943
        %v946 = vadd.f32 %v938, %v944
        %v947 = vmax.f32 %v946, 1e-06
        %v948 = vlog2.pop %v947
        %v949 = vmul.f32 %v948, 0.6931472
        %954 = vrot.lane.b32.xlu0 %v888, 96
        %v955 = vpop.permute.xlu0 %954
        %956 = vrot.lane.b32.xlu0 %v889, 96
        %v957 = vpop.permute.xlu0 %956
        %958 = vrot.lane.b32.xlu0 %v890, 96
        %v959 = vpop.permute.xlu0 %958
        %960 = vrot.lane.b32.xlu0 %v891, 96
        %v961 = vpop.permute.xlu0 %960
        %v963 = vsel %vm710, %v781, 0
        %v965 = vsel %vm710, %v955, 0
        %v967 = vsel %vm710, %v957, 0
        %v969 = vsel %vm710, %v959, 0
        %v971 = vsel %vm710, %v961, 0
        %973 = vmatprep.subr.mxu0 0.0
        %974 = vmatpush1.xpose.msra.mxu0 %v965
        %975 = vmatprep.subr.mxu0 0.0
        %976 = vmatpush1.xpose.msra.mxu0 %v967
        %977 = vmatprep.subr.mxu0 0.0
        %978 = vmatpush1.xpose.msra.mxu0 %v969
        %979 = vmatprep.subr.mxu0 0.0
        %980 = vmatpush1.xpose.msra.mxu0 %v971
        %981 = vmatprep.subr.mxu0 0.0
        %982 = vmatpush1.xpose.msra.mxu0 0.0
        %983 = vmatprep.subr.mxu0 0.0
        %984 = vmatpush1.xpose.msra.mxu0 0.0
        %985 = vmatprep.subr.mxu0 0.0
        %986 = vmatpush1.xpose.msra.mxu0 0.0
        %987 = vmatprep.subr.mxu0 0.0
        %988 = vmatpush1.xpose.msra.mxu0 0.0
        %989 = vmatprep.subr.mxu0 0.0
        %990 = vmatpush1.xpose.msra.mxu0 0.0
        %991 = vmatprep.subr.mxu0 0.0
        %992 = vmatpush1.xpose.msra.mxu0 0.0
        %993 = vmatprep.subr.mxu0 0.0
        %994 = vmatpush1.xpose.msra.mxu0 0.0
        %995 = vmatprep.subr.mxu0 0.0
        %996 = vmatpush1.xpose.msra.mxu0 0.0
        %997 = vmatprep.subr.mxu0 0.0
        %998 = vmatpush1.xpose.msra.mxu0 0.0
        %999 = vmatprep.subr.mxu0 0.0
        %1000 = vmatpush1.xpose.msra.mxu0 0.0
        %1001 = vmatprep.subr.mxu0 0.0
        %1002 = vmatpush1.xpose.msra.mxu0 0.0
        %1003 = vmatprep.subr.mxu0 0.0
        %1004 = vmatpush1.xpose.msra.mxu0 0.0
        %1005 = vmatprep.subr.mxu0 0.0
        %1006 = vmatpush1.xpose.msra.mxu0 0.0
        %1007 = vmatprep.subr.mxu0 0.0
        %1008 = vmatpush1.xpose.msra.mxu0 0.0
        %1009 = vmatprep.subr.mxu0 0.0
        %1010 = vmatpush1.xpose.msra.mxu0 0.0
        %1011 = vmatprep.subr.mxu0 0.0
        %1012 = vmatpush1.xpose.msra.mxu0 0.0
        %1013 = vmatprep.subr.mxu0 0.0
        %1014 = vmatpush1.xpose.msra.mxu0 0.0
        %1015 = vmatprep.subr.mxu0 0.0
        %1016 = vmatpush1.xpose.msra.mxu0 0.0
        %1017 = vmatprep.subr.mxu0 0.0
        %1018 = vmatpush1.xpose.msra.mxu0 0.0
        %1019 = vmatprep.subr.mxu0 0.0
        %1020 = vmatpush1.xpose.msra.mxu0 0.0
        %1021 = vmatprep.subr.mxu0 0.0
        %1022 = vmatpush1.xpose.msra.mxu0 0.0
        %1023 = vmatprep.subr.mxu0 0.0
        %1024 = vmatpush1.xpose.msra.mxu0 0.0
        %1025 = vmatprep.subr.mxu0 0.0
        %1026 = vmatpush1.xpose.msra.mxu0 0.0
        %1027 = vmatprep.subr.mxu0 0.0
        %1028 = vmatpush1.xpose.msra.mxu0 0.0
        %1029 = vmatprep.subr.mxu0 0.0
        %1030 = vmatpush1.xpose.msra.mxu0 0.0
        %1031 = vmatprep.subr.mxu0 0.0
        %1032 = vmatpush1.xpose.msra.mxu0 0.0
        %1033 = vmatprep.subr.mxu0 0.0
        %1034 = vmatpush1.xpose.msra.mxu0 0.0
        %1035 = vmatprep.subr.mxu0 0.0
        %1036 = vmatpush1.xpose.msra.mxu0 0.0
        %1037 = vmatprep.mubr.f32.mxu0 0.0
        %1038 = vmatmul.mubr.f32.gmra.mrb[0].mxu0 %v963
        %v1039 = vpop.f32.mrb[0].mxu0
        %v1040 = vadd.f32 %v949, %v1039
        %v1041 = vpop.f32.mrb[0].mxu0
        %1042 = vdwg.mxu0
        %v1043 = vld [vmem:[%s695] sm:$0x1]
        %v1045 = vlaneseq
        %v1046 = vshrl.u32 %v1045, 7
        %v1047 = vsub.s32 0, %v1046
        %v1048 = vrot.slane %v1043, %v1047
        %v1050 = vadd.f32 %v1040, %v1048
        %v1051 = vld [vmem:[#allocation13] sm:$0xff]
        %v1052 = vld [vmem:[#allocation13 + $0x8] sm:$0xff]
        %v1053 = vld [vmem:[#allocation13 + $0x10] sm:$0xff]
        %v1054 = vld [vmem:[#allocation13 + $0x18] sm:$0xff]
        %vm1055 = vcmask 64512
        %v1056 = vsel %vm1055, %v1050, -inf
        %1057 = vmax.xlane.f32.xlu0 %v1056
        %v1058 = vpop.xlane.xlu0 %1057
        %v1059 = vlaneseq
        %v1060 = vshrl.u32 %v1059, 7
        %v1061 = vsub.s32 0, %v1060
        %v1062 = vrot.slane %v1051, %v1061
        %v1063 = vmul.f32 %v1058, %v1062
        %v1064 = vadd.f32 %v1063, 0.0
        %vm1065 = vcmask 130112
        %v1066 = vsel %vm1065, %v1050, -inf
        %1067 = vmax.xlane.f32.xlu0 %v1066
        %v1068 = vpop.xlane.xlu0 %1067
        %v1069 = vlaneseq
        %v1070 = vshrl.u32 %v1069, 7
        %v1071 = vsub.s32 0, %v1070
        %v1072 = vrot.slane %v1052, %v1071
        %v1073 = vmul.f32 %v1068, %v1072
        %v1074 = vadd.f32 %v1064, %v1073
        %vm1075 = vcmask 195712
        %v1076 = vsel %vm1075, %v1050, -inf
        %1077 = vmax.xlane.f32.xlu0 %v1076
        %v1078 = vpop.xlane.xlu0 %1077
        %v1079 = vlaneseq
        %v1080 = vshrl.u32 %v1079, 7
        %v1081 = vsub.s32 0, %v1080
        %v1082 = vrot.slane %v1053, %v1081
        %v1083 = vmul.f32 %v1078, %v1082
        %v1084 = vadd.f32 %v1074, %v1083
        %vm1085 = vcmask 261312
        %v1086 = vsel %vm1085, %v1050, -inf
        %1087 = vmax.xlane.f32.xlu0 %v1086
        %v1088 = vpop.xlane.xlu0 %1087
        %v1089 = vlaneseq
        %v1090 = vshrl.u32 %v1089, 7
        %v1091 = vsub.s32 0, %v1090
        %v1092 = vrot.slane %v1054, %v1091
        %v1093 = vmul.f32 %v1088, %v1092
        %v1094 = vadd.f32 %v1084, %v1093
        %v1095 = vsub.f32 %v1050, %v1094
        %v1096 = vmul.f32 %v1095, 1.442695
        %v1097 = vpow.pop %v1096
        %v1099 = vsel %vm710, %v1097, 0
        %1101 = vmatprep.subr.mxu0 0.0
        %1102 = vmatpush1.msra.mxu0 %v1051
        %1103 = vmatprep.subr.mxu0 0.0
        %1104 = vmatpush1.msra.mxu0 %v1052
        %1105 = vmatprep.subr.mxu0 0.0
        %1106 = vmatpush1.msra.mxu0 %v1053
        %1107 = vmatprep.subr.mxu0 0.0
        %1108 = vmatpush1.msra.mxu0 %v1054
        %1109 = vmatprep.subr.mxu0 0.0
        %1110 = vmatpush1.msra.mxu0 0.0
        %1111 = vmatprep.subr.mxu0 0.0
        %1112 = vmatpush1.msra.mxu0 0.0
        %1113 = vmatprep.subr.mxu0 0.0
        %1114 = vmatpush1.msra.mxu0 0.0
        %1115 = vmatprep.subr.mxu0 0.0
        %1116 = vmatpush1.msra.mxu0 0.0
        %1117 = vmatprep.subr.mxu0 0.0
        %1118 = vmatpush1.msra.mxu0 0.0
        %1119 = vmatprep.subr.mxu0 0.0
        %1120 = vmatpush1.msra.mxu0 0.0
        %1121 = vmatprep.subr.mxu0 0.0
        %1122 = vmatpush1.msra.mxu0 0.0
        %1123 = vmatprep.subr.mxu0 0.0
        %1124 = vmatpush1.msra.mxu0 0.0
        %1125 = vmatprep.subr.mxu0 0.0
        %1126 = vmatpush1.msra.mxu0 0.0
        %1127 = vmatprep.subr.mxu0 0.0
        %1128 = vmatpush1.msra.mxu0 0.0
        %1129 = vmatprep.subr.mxu0 0.0
        %1130 = vmatpush1.msra.mxu0 0.0
        %1131 = vmatprep.subr.mxu0 0.0
        %1132 = vmatpush1.msra.mxu0 0.0
        %1133 = vmatprep.subr.mxu0 0.0
        %1134 = vmatpush1.msra.mxu0 0.0
        %1135 = vmatprep.subr.mxu0 0.0
        %1136 = vmatpush1.msra.mxu0 0.0
        %1137 = vmatprep.subr.mxu0 0.0
        %1138 = vmatpush1.msra.mxu0 0.0
        %1139 = vmatprep.subr.mxu0 0.0
        %1140 = vmatpush1.msra.mxu0 0.0
        %1141 = vmatprep.subr.mxu0 0.0
        %1142 = vmatpush1.msra.mxu0 0.0
        %1143 = vmatprep.subr.mxu0 0.0
        %1144 = vmatpush1.msra.mxu0 0.0
        %1145 = vmatprep.subr.mxu0 0.0
        %1146 = vmatpush1.msra.mxu0 0.0
        %1147 = vmatprep.subr.mxu0 0.0
        %1148 = vmatpush1.msra.mxu0 0.0
        %1149 = vmatprep.subr.mxu0 0.0
        %1150 = vmatpush1.msra.mxu0 0.0
        %1151 = vmatprep.subr.mxu0 0.0
        %1152 = vmatpush1.msra.mxu0 0.0
        %1153 = vmatprep.subr.mxu0 0.0
        %1154 = vmatpush1.msra.mxu0 0.0
        %1155 = vmatprep.subr.mxu0 0.0
        %1156 = vmatpush1.msra.mxu0 0.0
        %1157 = vmatprep.subr.mxu0 0.0
        %1158 = vmatpush1.msra.mxu0 0.0
        %1159 = vmatprep.subr.mxu0 0.0
        %1160 = vmatpush1.msra.mxu0 0.0
        %1161 = vmatprep.subr.mxu0 0.0
        %1162 = vmatpush1.msra.mxu0 0.0
        %1163 = vmatprep.subr.mxu0 0.0
        %1164 = vmatpush1.msra.mxu0 0.0
        %1165 = vmatprep.mubr.f32.mxu0 0.0
        %1166 = vmatmul.mubr.f32.gmra.mrb[0].mxu0 %v1099
        %v1167 = vpop.f32.mrb[0].mxu0
        %v1168 = vadd.f32 0.0, %v1167
        %v1169 = vpop.f32.mrb[0].mxu0
        %1170 = vdwg.mxu0
        %v1171 = vrcp.pop %v1168
        %v1172 = vmul.f32 %v1097, %v1171
        %v1174 = vsel %vm710, %v1172, 0
        %1176 = vmatprep.subr.mxu0 0.0
        %1177 = vmatpush1.msra.mxu0 %v892
        %1178 = vmatprep.subr.mxu0 0.0
        %1179 = vmatpush1.msra.mxu0 %v893
        %1180 = vmatprep.subr.mxu0 0.0
        %1181 = vmatpush1.msra.mxu0 %v894
        %1182 = vmatprep.subr.mxu0 0.0
        %1183 = vmatpush1.msra.mxu0 %v895
        %1184 = vmatprep.subr.mxu0 0.0
        %1185 = vmatpush1.msra.mxu0 0.0
        %1186 = vmatprep.subr.mxu0 0.0
        %1187 = vmatpush1.msra.mxu0 0.0
        %1188 = vmatprep.subr.mxu0 0.0
        %1189 = vmatpush1.msra.mxu0 0.0
        %1190 = vmatprep.subr.mxu0 0.0
        %1191 = vmatpush1.msra.mxu0 0.0
        %1192 = vmatprep.subr.mxu0 0.0
        %1193 = vmatpush1.msra.mxu0 0.0
        %1194 = vmatprep.subr.mxu0 0.0
        %1195 = vmatpush1.msra.mxu0 0.0
        %1196 = vmatprep.subr.mxu0 0.0
        %1197 = vmatpush1.msra.mxu0 0.0
        %1198 = vmatprep.subr.mxu0 0.0
        %1199 = vmatpush1.msra.mxu0 0.0
        %1200 = vmatprep.subr.mxu0 0.0
        %1201 = vmatpush1.msra.mxu0 0.0
        %1202 = vmatprep.subr.mxu0 0.0
        %1203 = vmatpush1.msra.mxu0 0.0
        %1204 = vmatprep.subr.mxu0 0.0
        %1205 = vmatpush1.msra.mxu0 0.0
        %1206 = vmatprep.subr.mxu0 0.0
        %1207 = vmatpush1.msra.mxu0 0.0
        %1208 = vmatprep.subr.mxu0 0.0
        %1209 = vmatpush1.msra.mxu0 0.0
        %1210 = vmatprep.subr.mxu0 0.0
        %1211 = vmatpush1.msra.mxu0 0.0
        %1212 = vmatprep.subr.mxu0 0.0
        %1213 = vmatpush1.msra.mxu0 0.0
        %1214 = vmatprep.subr.mxu0 0.0
        %1215 = vmatpush1.msra.mxu0 0.0
        %1216 = vmatprep.subr.mxu0 0.0
        %1217 = vmatpush1.msra.mxu0 0.0
        %1218 = vmatprep.subr.mxu0 0.0
        %1219 = vmatpush1.msra.mxu0 0.0
        %1220 = vmatprep.subr.mxu0 0.0
        %1221 = vmatpush1.msra.mxu0 0.0
        %1222 = vmatprep.subr.mxu0 0.0
        %1223 = vmatpush1.msra.mxu0 0.0
        %1224 = vmatprep.subr.mxu0 0.0
        %1225 = vmatpush1.msra.mxu0 0.0
        %1226 = vmatprep.subr.mxu0 0.0
        %1227 = vmatpush1.msra.mxu0 0.0
        %1228 = vmatprep.subr.mxu0 0.0
        %1229 = vmatpush1.msra.mxu0 0.0
        %1230 = vmatprep.subr.mxu0 0.0
        %1231 = vmatpush1.msra.mxu0 0.0
        %1232 = vmatprep.subr.mxu0 0.0
        %1233 = vmatpush1.msra.mxu0 0.0
        %1234 = vmatprep.subr.mxu0 0.0
        %1235 = vmatpush1.msra.mxu0 0.0
        %1236 = vmatprep.subr.mxu0 0.0
        %1237 = vmatpush1.msra.mxu0 0.0
        %1238 = vmatprep.subr.mxu0 0.0
        %1239 = vmatpush1.msra.mxu0 0.0
        %1240 = vmatprep.mubr.f32.mxu0 0.0
        %1241 = vmatmul.mubr.f32.gmra.mrb[0].mxu0 %v1174
        %v1242 = vpop.f32.mrb[0].mxu0
        %v1243 = vadd.f32 0.0, %v1242
        %v1244 = vpop.f32.mrb[0].mxu0
        %1245 = vdwg.mxu0
        %v1246 = vld [vmem:[#allocation14] sm:$0xff]
        %v1247 = vld [vmem:[#allocation14 + $0x8] sm:$0xff]
        %v1248 = vld [vmem:[#allocation14 + $0x10] sm:$0xff]
        %v1249 = vld [vmem:[#allocation14 + $0x18] sm:$0xff]
        %v1250 = vld [vmem:[%s13] sm:$0x1]
        %v1252 = vlaneseq
        %v1253 = vshrl.u32 %v1252, 7
        %v1254 = vsub.s32 0, %v1253
        %v1255 = vrot.slane %v1250, %v1254
        %v1258 = vsel %vm710, %v1243, 0
        %1260 = vmatprep.subr.mxu0 0.0
        %1261 = vmatpush1.msra.mxu0 %v1246
        %1262 = vmatprep.subr.mxu0 0.0
        %1263 = vmatpush1.msra.mxu0 %v1247
        %1264 = vmatprep.subr.mxu0 0.0
        %1265 = vmatpush1.msra.mxu0 %v1248
        %1266 = vmatprep.subr.mxu0 0.0
        %1267 = vmatpush1.msra.mxu0 %v1249
        %1268 = vmatprep.subr.mxu0 0.0
        %1269 = vmatpush1.msra.mxu0 0.0
        %1270 = vmatprep.subr.mxu0 0.0
        %1271 = vmatpush1.msra.mxu0 0.0
        %1272 = vmatprep.subr.mxu0 0.0
        %1273 = vmatpush1.msra.mxu0 0.0
        %1274 = vmatprep.subr.mxu0 0.0
        %1275 = vmatpush1.msra.mxu0 0.0
        %1276 = vmatprep.subr.mxu0 0.0
        %1277 = vmatpush1.msra.mxu0 0.0
        %1278 = vmatprep.subr.mxu0 0.0
        %1279 = vmatpush1.msra.mxu0 0.0
        %1280 = vmatprep.subr.mxu0 0.0
        %1281 = vmatpush1.msra.mxu0 0.0
        %1282 = vmatprep.subr.mxu0 0.0
        %1283 = vmatpush1.msra.mxu0 0.0
        %1284 = vmatprep.subr.mxu0 0.0
        %1285 = vmatpush1.msra.mxu0 0.0
        %1286 = vmatprep.subr.mxu0 0.0
        %1287 = vmatpush1.msra.mxu0 0.0
        %1288 = vmatprep.subr.mxu0 0.0
        %1289 = vmatpush1.msra.mxu0 0.0
        %1290 = vmatprep.subr.mxu0 0.0
        %1291 = vmatpush1.msra.mxu0 0.0
        %1292 = vmatprep.subr.mxu0 0.0
        %1293 = vmatpush1.msra.mxu0 0.0
        %1294 = vmatprep.subr.mxu0 0.0
        %1295 = vmatpush1.msra.mxu0 0.0
        %1296 = vmatprep.subr.mxu0 0.0
        %1297 = vmatpush1.msra.mxu0 0.0
        %1298 = vmatprep.subr.mxu0 0.0
        %1299 = vmatpush1.msra.mxu0 0.0
        %1300 = vmatprep.subr.mxu0 0.0
        %1301 = vmatpush1.msra.mxu0 0.0
        %1302 = vmatprep.subr.mxu0 0.0
        %1303 = vmatpush1.msra.mxu0 0.0
        %1304 = vmatprep.subr.mxu0 0.0
        %1305 = vmatpush1.msra.mxu0 0.0
        %1306 = vmatprep.subr.mxu0 0.0
        %1307 = vmatpush1.msra.mxu0 0.0
        %1308 = vmatprep.subr.mxu0 0.0
        %1309 = vmatpush1.msra.mxu0 0.0
        %1310 = vmatprep.subr.mxu0 0.0
        %1311 = vmatpush1.msra.mxu0 0.0
        %1312 = vmatprep.subr.mxu0 0.0
        %1313 = vmatpush1.msra.mxu0 0.0
        %1314 = vmatprep.subr.mxu0 0.0
        %1315 = vmatpush1.msra.mxu0 0.0
        %1316 = vmatprep.subr.mxu0 0.0
        %1317 = vmatpush1.msra.mxu0 0.0
        %1318 = vmatprep.subr.mxu0 0.0
        %1319 = vmatpush1.msra.mxu0 0.0
        %1320 = vmatprep.subr.mxu0 0.0
        %1321 = vmatpush1.msra.mxu0 0.0
        %1322 = vmatprep.subr.mxu0 0.0
        %1323 = vmatpush1.msra.mxu0 0.0
        %1324 = vmatprep.mubr.f32.mxu0 0.0
        %1325 = vmatmul.mubr.f32.gmra.mrb[0].mxu0 %v1258
        %v1326 = vpop.f32.mrb[0].mxu0
        %v1327 = vadd.f32 %v1255, %v1326
        %v1328 = vpop.f32.mrb[0].mxu0
        %1329 = vdwg.mxu0
        %v1330 = vadd.f32 %v696, %v1327
        %v1331 = vsel %vm710, %v1330, 0.0
        %1332 = vadd.xlane.f32.xlu0 %v1331
        %v1333 = vpop.xlane.xlu0 %1332
        %v1334 = vrcp.pop 32.0
        %v1335 = vmul.f32 %v1333, %v1334
        %v1336 = vsub.f32 %v1330, %v1335
        %v1337 = vmul.f32 %v1336, %v1336
        %v1338 = vsel %vm710, %v1337, 0.0
        %1339 = vadd.xlane.f32.xlu0 %v1338
        %v1340 = vpop.xlane.xlu0 %1339
        %v1341 = vmul.f32 %v1340, %v1334
        %v1342 = vadd.f32 %v1341, 1e-05
        %v1343 = vrsqrt.pop %v1342
        %v1344 = vmul.f32 %v1336, %v1343
        %v1345 = vld [vmem:[%s14] sm:$0x1]
        %v1347 = vlaneseq
        %v1348 = vshrl.u32 %v1347, 7
        %v1349 = vsub.s32 0, %v1348
        %v1350 = vrot.slane %v1345, %v1349
        %v1352 = vmul.f32 %v1344, %v1350
        %v1353 = vld [vmem:[%s15] sm:$0x1]
        %v1355 = vlaneseq
        %v1356 = vshrl.u32 %v1355, 7
        %v1357 = vsub.s32 0, %v1356
        %v1358 = vrot.slane %v1353, %v1357
        %v1360 = vadd.f32 %v1352, %v1358
        %1361 = vst.msk [vmem:[%s692] sm:$0xff] %vm710, %v1360
        %s1362 = sand.u32 %s403, 1
        %s1363 = scalar_lea.sflag [#allocation4], %s1362
        %s1364 = sand.u32 %s403, 1
        %s1365 = smul.addr %s1364, 8
        %s1366 = scalar_lea.vmem [#allocation16], %s1365
        // Predicated region
        $region117: #{tpu_custom_call.1} parent=83 // pred_check
          %p1367 = pneg %p413
        $region118: #{tpu_custom_call.1} parent=83 // pred_check_branch
          %1369 = sbr.rel (%p1367) target = $region120
        $region119: #{tpu_custom_call.1} parent=83 // pred_region
          %s1371 = ssub.s32 128, 128
          %1372 = vsyncadd %s1363, %s1371
          %s1373 = smul.addr %s39, 128
          %s1374 = scalar_lea.hbm %s16, %s1373
          %s1376 = sshll.u32 %s1366, 4
          %s1377 = int_to_ptr.vmem [resolvable:$true] %s1376
          %1379 = dma.vmem_to_hbm [thread:$0]  %s1377, 128, %s1374, %s1363
        $region120: #{tpu_custom_call.1} parent=83 // pred_fallthru
          _
      $region84: #{tpu_custom_call.1} parent=5 // pred_fallthru
        _
      %p1380 = scmp.le.s32.totalorder 2, %s34
      // Predicated region
      $region121: #{tpu_custom_call.1} parent=5 // pred_check
        %p1381 = pneg %p1380
      $region122: #{tpu_custom_call.1} parent=5 // pred_check_branch
        %1383 = sbr.rel (%p1381) target = $region124
      $region123: #{tpu_custom_call.1} parent=5 // pred_region
        %s1384 = ssub.s32 %s34, 2
        // Predicated region
        $region125: #{tpu_custom_call.1} parent=123 // pred_check
          %p1385 = pneg %p419
        $region126: #{tpu_custom_call.1} parent=123 // pred_check_branch
          %1387 = sbr.rel (%p1385) target = $region128
        $region127: #{tpu_custom_call.1} parent=123 // pred_region
          %s1388 = sand.u32 %s404, 1
          %s1389 = scalar_lea.sflag [#allocation4], %s1388
          %s1390 = sand.u32 %s404, 1
          %s1391 = smul.addr %s1390, 8
          %s1392 = scalar_lea.vmem [#allocation16], %s1391
          %1393 = dma.done %s1389, 128
        $region128: #{tpu_custom_call.1} parent=123 // pred_fallthru
          _
      $region124: #{tpu_custom_call.1} parent=5 // pred_fallthru
        _
    $region6: #{tpu_custom_call.1} parent=1 // loop_footer
      %s38 = sadd.s32 1, %s34
    $region7: #{tpu_custom_call.1} parent=1 // loop_footer_branch
      %33 = sbr.rel target = $region3
    $region8: #{tpu_custom_call.1} parent=1 // loop_exit
      _
    %1394 = vsyncpa [#allocation3], 1
    %s1395 = scalar_lea.sflag [#allocation3], 1
    %1396 = vsyncpa %s1395, 1
    %1397 = vsyncpa [#allocation6], 1
    %s1398 = scalar_lea.sflag [#allocation6], 1
    %1399 = vsyncpa %s1398, 1
    %1400 = vsyncpa [#allocation9], 1
    %1401 = vsyncpa [#allocation12], 1
    %1402 = vsyncpa [#allocation15], 1
    %1403 = vsyncpa [#allocation4], 1
    %s1404 = scalar_lea.sflag [#allocation4], 1
    %1405 = vsyncpa %s1404, 1

</llo_original>
